<compile_context>
chip_gen: v7x
topology: tpu7x:2x2x1
jax: 0.10.0
libtpu: 0.0.40
codegen_flags: <defaults>
</compile_context>

<pallas_src>
import math

import jax
import jax.numpy as jnp
from jax.experimental import pallas as pl
from jax.experimental.pallas import tpu as pltpu

# ----------------------------- model config ---------------------------------
B = 2            # batch
S = 8            # sequence length
H = 128          # hidden size      (768 in bert-base, scaled down)
NH = 4           # attention heads  (12 in bert-base)
DH = H // NH     # head dim
I = 256          # intermediate FFN size (3072 in bert-base)
L = 2            # encoder layers   (12 in bert-base)
VOCAB = 100
MAX_POS = 32
TYPE_VOCAB = 2
OUT_SIZE = 4     # `output_size` of the classifier head
OUT_PAD = 128    # classifier output padded to a full lane width
LN_EPS = 1e-12   # BERT LayerNorm eps

M = B * S        # rows of the resident activation slab
BHS = B * NH * S  # rows of the head-major attention layout


# --------------------------- in-kernel helpers -------------------------------
def _layernorm(x, g, b):
    mu = jnp.mean(x, axis=-1, keepdims=True)
    var = jnp.mean(jnp.square(x - mu), axis=-1, keepdims=True)
    return (x - mu) * jax.lax.rsqrt(var + LN_EPS) * g + b


def _gelu(y):
    # TODO(synk): bert-base uses exact erf-GELU; tanh approximation used here.
    c = math.sqrt(2.0 / math.pi)
    return 0.5 * y * (1.0 + jnp.tanh(c * (y + 0.044715 * y * y * y)))


def _bf16_dot(x_f32, w_ref, b_f32):
    """(x @ w) + b with bf16 MXU operands and f32 accumulation."""
    y = jnp.dot(x_f32.astype(jnp.bfloat16), w_ref[...],
                preferred_element_type=jnp.float32)
    return y + b_f32


# --------------------- fused encoder + head kernel ---------------------------
def _encoder_kernel(x_ref, eg_ref, eb_ref, bias_ref,
                    wqkv_ref, bqkv_ref, wo_ref, bo_ref,
                    ln1g_ref, ln1b_ref, wi_ref, bi_ref,
                    wf_ref, bf_ref, ln2g_ref, ln2b_ref,
                    pw_ref, pb_ref, fw_ref, fb_ref,
                    head_ref, act_ref):
    l = pl.program_id(0)

    # Layer 0: initialize the resident activation with the embedding LayerNorm.
    @pl.when(l == 0)
    def _():
        act_ref[...] = _layernorm(x_ref[...], eg_ref[...], eb_ref[...])
        head_ref[...] = jnp.zeros_like(head_ref)

    x = act_ref[...]                                    # (M, H) f32, resident

    # ---- fused QKV projection: one (H, 3H) matmul ----
    qkv = _bf16_dot(x, wqkv_ref, bqkv_ref[...])         # (M, 3H) f32

    # ---- head-major rearrangement: (B*NH*S, DH); row = (b*NH + h)*S + s ----
    # Static slices + concatenates (XLU work), one bf16 cast per tensor.
    def head_major(col0):
        return jnp.concatenate(
            [qkv[b * S:(b + 1) * S, col0 + h * DH:col0 + (h + 1) * DH]
             for b in range(B) for h in range(NH)],
            axis=0)                                     # (BHS, DH) f32

    q_hm = head_major(0).astype(jnp.bfloat16)
    k_hm = head_major(H).astype(jnp.bfloat16)
    v_hm = head_major(2 * H).astype(jnp.bfloat16)

    # ---- single score matmul for all batches & heads ----
    s = jax.lax.dot_general(q_hm, k_hm, (((1,), (1,)), ((), ())),
                            preferred_element_type=jnp.float32)   # (BHS, BHS)
    # bias_ref combines the block-diagonal batch/head mask and key padding.
    s = s * (1.0 / math.sqrt(DH)) + bias_ref[...]
    s = s - jnp.max(s, axis=-1, keepdims=True)
    p = jnp.exp(s)
    p = p * pl.reciprocal(jnp.sum(p, axis=-1, keepdims=True), approx=True)

    # ---- single PV matmul ----
    ctx_hm = jnp.dot(p.astype(jnp.bfloat16), v_hm,
                     preferred_element_type=jnp.float32)          # (BHS, DH)

    # ---- back to token-major (M, H) ----
    ctx = jnp.concatenate(
        [jnp.concatenate(
            [ctx_hm[(b * NH + h) * S:(b * NH + h + 1) * S, :]
             for h in range(NH)], axis=1)
         for b in range(B)],
        axis=0)                                                   # (M, H)

    # ---- attention output projection + residual + LayerNorm1 ----
    attn = _bf16_dot(ctx, wo_ref, bo_ref[...])
    x1 = _layernorm(x + attn, ln1g_ref[...], ln1b_ref[...])

    # ---- feed forward (GELU) + residual + LayerNorm2 ----
    hmid = _gelu(_bf16_dot(x1, wi_ref, bi_ref[...]))
    ff = _bf16_dot(hmid, wf_ref, bf_ref[...])
    x2 = _layernorm(x1 + ff, ln2g_ref[...], ln2b_ref[...])
    act_ref[...] = x2

    # ---- fused pooler + classifier head on the final layer ----
    @pl.when(l == pl.num_programs(0) - 1)
    def _():
        # [CLS] rows of the resident slab (rows b*S).
        cls = jnp.concatenate([x2[b * S:b * S + 1, :] for b in range(B)],
                              axis=0)                             # (B, H)
        pooled = jnp.tanh(_bf16_dot(cls, pw_ref, pb_ref[...]))
        # dropout is identity at inference; classifier Linear (padded to 128).
        head_ref[...] = _bf16_dot(pooled, fw_ref,
                                  fb_ref[...]).astype(head_ref.dtype)


def bert_encoder_and_head(x_emb, attn_bias, p):
    """emb-LayerNorm + L transformer layers + pooler + classifier, one call."""
    def const2d(shape):
        return pl.BlockSpec(shape, lambda l: (0, 0))

    def per_layer(d1, d2):
        return pl.BlockSpec((pl.Squeezed(), d1, d2), lambda l: (l, 0, 0))

    # advisory cost hint for XLA's scheduler
    flops = (L * (2 * M * H * 3 * H            # qkv projection
                  + 4 * BHS * BHS * DH         # scores + PV
                  + 2 * M * H * H              # attention output projection
                  + 4 * M * H * I)             # FFN
             + 2 * B * H * H + 2 * B * H * OUT_PAD)
    transcendentals = L * (BHS * BHS + M * I) + B * H
    bytes_accessed = (L * 2 * (H * 3 * H + H * H + 2 * H * I)   # bf16 weights
                      + L * 4 * (10 * H + I)                    # f32 bias/LN
                      + 4 * M * H + 4 * BHS * BHS               # acts + bias
                      + 2 * (H * H + H * OUT_PAD)               # head weights
                      + 4 * B * OUT_PAD)                        # logits out

    return pl.pallas_call(
        _encoder_kernel,
        out_shape=jax.ShapeDtypeStruct((B, OUT_PAD), jnp.float32),
        grid_spec=pltpu.PrefetchScalarGridSpec(
            num_scalar_prefetch=0,
            grid=(L,),
            in_specs=[
                const2d((M, H)),          # embeddings (pre-LN)
                const2d((1, H)),          # emb_ln gamma
                const2d((1, H)),          # emb_ln beta
                const2d((BHS, BHS)),      # combined attention bias
                per_layer(H, 3 * H),      # wqkv  (bf16)
                per_layer(1, 3 * H),      # bqkv
                per_layer(H, H),          # wo    (bf16)
                per_layer(1, H),          # bo
                per_layer(1, H),          # ln1 gamma
                per_layer(1, H),          # ln1 beta
                per_layer(H, I),          # wi    (bf16)
                per_layer(1, I),          # bi
                per_layer(I, H),          # wf    (bf16)
                per_layer(1, H),          # bf
                per_layer(1, H),          # ln2 gamma
                per_layer(1, H),          # ln2 beta
                const2d((H, H)),          # pooler weight (bf16)
                const2d((1, H)),          # pooler bias
                const2d((H, OUT_PAD)),    # classifier weight (bf16, padded)
                const2d((1, OUT_PAD)),    # classifier bias (padded)
            ],
            out_specs=const2d((B, OUT_PAD)),      # logits, written once
            scratch_shapes=[pltpu.VMEM((M, H), jnp.float32)],   # resident acts
        ),
        compiler_params=pltpu.CompilerParams(
            dimension_semantics=("arbitrary",),
            # explicit scoped-VMEM limit; required headroom when scaled to
            # bert-base dims (v5e default 16 MiB, v7x physical 64 MiB).
            vmem_limit_bytes=32 * 1024 * 1024),
        cost_estimate=pl.CostEstimate(flops=flops,
                                      transcendentals=transcendentals,
                                      bytes_accessed=bytes_accessed),
    )(x_emb, p["emb_ln_g"], p["emb_ln_b"], attn_bias,
      p["wqkv"], p["bqkv"], p["wo"], p["bo"],
      p["ln1_g"], p["ln1_b"], p["wi"], p["bi"],
      p["wf"], p["bf"], p["ln2_g"], p["ln2_b"],
      p["pool_w"], p["pool_b"], p["fc_w"], p["fc_b"])


# ------------------------------ parameters -----------------------------------
def init_params(key):
    keys = iter(jax.random.split(key, 32))
    bf = jnp.bfloat16

    def nrm(shape, dtype=jnp.float32):
        return (0.02 * jax.random.normal(next(keys), shape,
                                         jnp.float32)).astype(dtype)

    fc_core = 0.02 * jax.random.normal(next(keys), (H, OUT_SIZE), jnp.float32)
    fc_w = jnp.zeros((H, OUT_PAD), jnp.float32).at[:, :OUT_SIZE].set(fc_core)

    return {
        # embeddings (gathered in XLA)
        "emb_word": nrm((VOCAB, H)),
        "emb_pos": nrm((MAX_POS, H)),
        "emb_type": nrm((TYPE_VOCAB, H)),
        "emb_ln_g": jnp.ones((1, H), jnp.float32),
        "emb_ln_b": jnp.zeros((1, H), jnp.float32),
        # per-layer weights stacked on a leading L axis (bf16 matmul operands)
        "wqkv": nrm((L, H, 3 * H), bf),
        "bqkv": jnp.zeros((L, 1, 3 * H), jnp.float32),
        "wo": nrm((L, H, H), bf),
        "bo": jnp.zeros((L, 1, H), jnp.float32),
        "ln1_g": jnp.ones((L, 1, H), jnp.float32),
        "ln1_b": jnp.zeros((L, 1, H), jnp.float32),
        "wi": nrm((L, H, I), bf),
        "bi": jnp.zeros((L, 1, I), jnp.float32),
        "wf": nrm((L, I, H), bf),
        "bf": jnp.zeros((L, 1, H), jnp.float32),
        "ln2_g": jnp.ones((L, 1, H), jnp.float32),
        "ln2_b": jnp.zeros((L, 1, H), jnp.float32),
        # pooler + classifier head (fc output padded to 128 lanes)
        "pool_w": nrm((H, H), bf),
        "pool_b": jnp.zeros((1, H), jnp.float32),
        "fc_w": fc_w.astype(bf),
        "fc_b": jnp.zeros((1, OUT_PAD), jnp.float32),
    }


# ------------------------------ forward pass ----------------------------------
def _build_attention_bias(mask):
    """(BHS, BHS) additive bias combining the block-diagonal batch/head mask
    with the key-padding mask, for the head-major attention layout."""
    key_bias = (1.0 - mask.astype(jnp.float32)) * -1e9            # (B, S)
    block = jnp.kron(jnp.eye(B * NH, dtype=jnp.float32),
                     jnp.ones((S, S), jnp.float32))                # (BHS, BHS)
    col = jnp.tile(key_bias[:, None, :], (1, NH, 1)).reshape(1, BHS)
    return (1.0 - block) * -1e9 + col


def bert_class_forward(params, ids, mask):
    """Equivalent of BERTClass.forward(ids, mask): returns (B, OUT_SIZE)."""
    Bq, Sq = ids.shape

    # embeddings: word + position + token_type(=0); gathers stay in XLA.
    x = (jnp.take(params["emb_word"], ids, axis=0)
         + params["emb_pos"][:Sq][None, :, :]
         + jnp.take(params["emb_type"], jnp.zeros_like(ids), axis=0))
    x = x.reshape(Bq * Sq, H).astype(jnp.float32)

    attn_bias = _build_attention_bias(mask)                       # (BHS, BHS)

    # single fused pallas_call: emb-LN + encoder layers + pooler + classifier
    logits_pad = bert_encoder_and_head(x, attn_bias, params)      # (B, 128)
    return logits_pad[:, :OUT_SIZE]


# --------------------------------- main ---------------------------------------
if __name__ == "__main__":
    key = jax.random.PRNGKey(0)
    pkey, ikey = jax.random.split(key)
    params = init_params(pkey)

    ids = jax.random.randint(ikey, (B, S), 0, VOCAB, dtype=jnp.int32)
    # attention mask: last two positions of batch element 1 are padding
    mask = jnp.ones((B, S), jnp.int32).at[1, S - 2:].set(0)

    fwd = jax.jit(bert_class_forward)
    out = fwd(params, ids, mask)
    jax.block_until_ready(out)

    assert out.shape == (B, OUT_SIZE) and out.dtype == jnp.float32
    assert bool(jnp.all(jnp.isfinite(out)))
    print("KERNEL_OK")
</pallas_src>

<mosaic_0001>
module attributes {stable_mosaic.version = 11 : i64} {
  func.func @_encoder_kernel(%arg0: i32, %arg1: memref<16x128xf32, #tpu.memory_space<vmem>>, %arg2: memref<1x128xf32, #tpu.memory_space<vmem>>, %arg3: memref<1x128xf32, #tpu.memory_space<vmem>>, %arg4: memref<64x64xf32, #tpu.memory_space<vmem>>, %arg5: memref<1x128x384xbf16, #tpu.memory_space<vmem>>, %arg6: memref<1x1x384xf32, #tpu.memory_space<vmem>>, %arg7: memref<1x128x128xbf16, #tpu.memory_space<vmem>>, %arg8: memref<1x1x128xf32, #tpu.memory_space<vmem>>, %arg9: memref<1x1x128xf32, #tpu.memory_space<vmem>>, %arg10: memref<1x1x128xf32, #tpu.memory_space<vmem>>, %arg11: memref<1x128x256xbf16, #tpu.memory_space<vmem>>, %arg12: memref<1x1x256xf32, #tpu.memory_space<vmem>>, %arg13: memref<1x256x128xbf16, #tpu.memory_space<vmem>>, %arg14: memref<1x1x128xf32, #tpu.memory_space<vmem>>, %arg15: memref<1x1x128xf32, #tpu.memory_space<vmem>>, %arg16: memref<1x1x128xf32, #tpu.memory_space<vmem>>, %arg17: memref<128x128xbf16, #tpu.memory_space<vmem>>, %arg18: memref<1x128xf32, #tpu.memory_space<vmem>>, %arg19: memref<128x128xbf16, #tpu.memory_space<vmem>>, %arg20: memref<1x128xf32, #tpu.memory_space<vmem>>, %arg21: memref<2x128xf32, #tpu.memory_space<vmem>>, %arg22: memref<16x128xf32, #tpu.memory_space<vmem>>) attributes {dimension_semantics = [#tpu.dimension_semantics<arbitrary>], iteration_bounds = array<i64: 2>, scalar_prefetch = 0 : i64, scratch_operands = 1 : i64, tpu.core_type = #tpu.core_type<tc>, window_params = [{pipeline_mode = #tpu.pipeline_mode<synchronous>, transform_indices = @transform_0, window_bounds = array<i64: 16, 128>}, {pipeline_mode = #tpu.pipeline_mode<synchronous>, transform_indices = @transform_1, window_bounds = array<i64: 1, 128>}, {pipeline_mode = #tpu.pipeline_mode<synchronous>, transform_indices = @transform_2, window_bounds = array<i64: 1, 128>}, {pipeline_mode = #tpu.pipeline_mode<synchronous>, transform_indices = @transform_3, window_bounds = array<i64: 64, 64>}, {transform_indices = @transform_4, window_bounds = array<i64: 1, 128, 384>}, {transform_indices = @transform_5, window_bounds = array<i64: 1, 1, 384>}, {transform_indices = @transform_6, window_bounds = array<i64: 1, 128, 128>}, {transform_indices = @transform_7, window_bounds = array<i64: 1, 1, 128>}, {transform_indices = @transform_8, window_bounds = array<i64: 1, 1, 128>}, {transform_indices = @transform_9, window_bounds = array<i64: 1, 1, 128>}, {transform_indices = @transform_10, window_bounds = array<i64: 1, 128, 256>}, {transform_indices = @transform_11, window_bounds = array<i64: 1, 1, 256>}, {transform_indices = @transform_12, window_bounds = array<i64: 1, 256, 128>}, {transform_indices = @transform_13, window_bounds = array<i64: 1, 1, 128>}, {transform_indices = @transform_14, window_bounds = array<i64: 1, 1, 128>}, {transform_indices = @transform_15, window_bounds = array<i64: 1, 1, 128>}, {pipeline_mode = #tpu.pipeline_mode<synchronous>, transform_indices = @transform_16, window_bounds = array<i64: 128, 128>}, {pipeline_mode = #tpu.pipeline_mode<synchronous>, transform_indices = @transform_17, window_bounds = array<i64: 1, 128>}, {pipeline_mode = #tpu.pipeline_mode<synchronous>, transform_indices = @transform_18, window_bounds = array<i64: 128, 128>}, {pipeline_mode = #tpu.pipeline_mode<synchronous>, transform_indices = @transform_19, window_bounds = array<i64: 1, 128>}, {pipeline_mode = #tpu.pipeline_mode<synchronous>, transform_indices = @transform_20, window_bounds = array<i64: 2, 128>}]} {
    %c0_i32 = arith.constant 0 : i32
    %0 = arith.cmpi eq, %arg0, %c0_i32 : i32
    %1 = arith.extui %0 : i1 to i32
    %c0_i32_0 = arith.constant 0 : i32
    %2 = arith.cmpi ne, %1, %c0_i32_0 : i32
    scf.if %2 {
      %c0_65 = arith.constant 0 : index
      %c0_66 = arith.constant 0 : index
      %165 = vector.load %arg1[%c0_65, %c0_66] : memref<16x128xf32, #tpu.memory_space<vmem>>, vector<16x128xf32>
      %c0_67 = arith.constant 0 : index
      %c0_68 = arith.constant 0 : index
      %166 = vector.load %arg2[%c0_67, %c0_68] : memref<1x128xf32, #tpu.memory_space<vmem>>, vector<1x128xf32>
      %c0_69 = arith.constant 0 : index
      %c0_70 = arith.constant 0 : index
      %167 = vector.load %arg3[%c0_69, %c0_70] : memref<1x128xf32, #tpu.memory_space<vmem>>, vector<1x128xf32>
      %cst_71 = arith.constant dense<0.000000e+00> : vector<16xf32>
      %168 = vector.multi_reduction <add>, %165, %cst_71 [1] : vector<16x128xf32> to vector<16xf32>
      %169 = vector.shape_cast %168 : vector<16xf32> to vector<16x1xf32>
      %cst_72 = arith.constant 1.280000e+02 : f32
      %170 = vector.broadcast %cst_72 : f32 to vector<16x1xf32>
      %171 = arith.divf %169, %170 : vector<16x1xf32>
      %172 = vector.broadcast %171 : vector<16x1xf32> to vector<16x128xf32>
      %173 = arith.subf %165, %172 : vector<16x128xf32>
      %174 = arith.mulf %173, %173 : vector<16x128xf32>
      %cst_73 = arith.constant dense<0.000000e+00> : vector<16xf32>
      %175 = vector.multi_reduction <add>, %174, %cst_73 [1] : vector<16x128xf32> to vector<16xf32>
      %176 = vector.shape_cast %175 : vector<16xf32> to vector<16x1xf32>
      %cst_74 = arith.constant 1.280000e+02 : f32
      %177 = vector.broadcast %cst_74 : f32 to vector<16x1xf32>
      %178 = arith.divf %176, %177 : vector<16x1xf32>
      %179 = vector.broadcast %171 : vector<16x1xf32> to vector<16x128xf32>
      %180 = arith.subf %165, %179 : vector<16x128xf32>
      %cst_75 = arith.constant 9.99999996E-13 : f32
      %181 = vector.broadcast %cst_75 : f32 to vector<16x1xf32>
      %182 = arith.addf %178, %181 : vector<16x1xf32>
      %183 = math.rsqrt %182 : vector<16x1xf32>
      %184 = vector.broadcast %183 : vector<16x1xf32> to vector<16x128xf32>
      %185 = arith.mulf %180, %184 : vector<16x128xf32>
      %186 = vector.broadcast %166 : vector<1x128xf32> to vector<16x128xf32>
      %187 = arith.mulf %185, %186 : vector<16x128xf32>
      %188 = vector.broadcast %167 : vector<1x128xf32> to vector<16x128xf32>
      %189 = arith.addf %187, %188 : vector<16x128xf32>
      %c0_76 = arith.constant 0 : index
      %c0_77 = arith.constant 0 : index
      %190 = vector.load %arg22[%c0_76, %c0_77] : memref<16x128xf32, #tpu.memory_space<vmem>>, vector<16x128xf32>
      tpu.vector_store %arg22[%c0_76, %c0_77], %189 {strides = array<i32>} : memref<16x128xf32, #tpu.memory_space<vmem>>, vector<16x128xf32>,
      %cst_78 = arith.constant 0.000000e+00 : f32
      %191 = vector.broadcast %cst_78 : f32 to vector<2x128xf32>
      %c0_79 = arith.constant 0 : index
      %c0_80 = arith.constant 0 : index
      %192 = vector.load %arg21[%c0_79, %c0_80] : memref<2x128xf32, #tpu.memory_space<vmem>>, vector<2x128xf32>
      tpu.vector_store %arg21[%c0_79, %c0_80], %191 {strides = array<i32>} : memref<2x128xf32, #tpu.memory_space<vmem>>, vector<2x128xf32>,
    } else {
    }
    %c0 = arith.constant 0 : index
    %c0_1 = arith.constant 0 : index
    %3 = vector.load %arg22[%c0, %c0_1] : memref<16x128xf32, #tpu.memory_space<vmem>>, vector<16x128xf32>
    %c0_2 = arith.constant 0 : index
    %c0_3 = arith.constant 0 : index
    %c0_4 = arith.constant 0 : index
    %4 = vector.load %arg6[%c0_2, %c0_3, %c0_4] : memref<1x1x384xf32, #tpu.memory_space<vmem>>, vector<1x1x384xf32>
    %5 = vector.shape_cast %4 : vector<1x1x384xf32> to vector<1x384xf32>
    %6 = arith.truncf %3 : vector<16x128xf32> to vector<16x128xbf16>
    %c0_5 = arith.constant 0 : index
    %c0_6 = arith.constant 0 : index
    %c0_7 = arith.constant 0 : index
    %7 = vector.load %arg5[%c0_5, %c0_6, %c0_7] : memref<1x128x384xbf16, #tpu.memory_space<vmem>>, vector<1x128x384xbf16>
    %8 = vector.shape_cast %7 : vector<1x128x384xbf16> to vector<128x384xbf16>
    %cst = arith.constant dense<0.000000e+00> : vector<16x384xf32>
    %9 = tpu.matmul %6, %8, %cst {dimension_numbers = #tpu.dot_dimension_numbers<[1], [0], [0], [1], [0, 0, 1, 1], [], []>} : vector<16x128xbf16>, vector<128x384xbf16>, vector<16x384xf32> -> vector<16x384xf32>
    %10 = vector.broadcast %5 : vector<1x384xf32> to vector<16x384xf32>
    %11 = arith.addf %9, %10 : vector<16x384xf32>
    %12 = vector.extract_strided_slice %11 {offsets = [0, 0], sizes = [8, 32], strides = [1, 1]} : vector<16x384xf32> to vector<8x32xf32>
    %13 = vector.extract_strided_slice %11 {offsets = [0, 32], sizes = [8, 32], strides = [1, 1]} : vector<16x384xf32> to vector<8x32xf32>
    %14 = vector.extract_strided_slice %11 {offsets = [0, 64], sizes = [8, 32], strides = [1, 1]} : vector<16x384xf32> to vector<8x32xf32>
    %15 = vector.extract_strided_slice %11 {offsets = [0, 96], sizes = [8, 32], strides = [1, 1]} : vector<16x384xf32> to vector<8x32xf32>
    %16 = vector.extract_strided_slice %11 {offsets = [8, 0], sizes = [8, 32], strides = [1, 1]} : vector<16x384xf32> to vector<8x32xf32>
    %17 = vector.extract_strided_slice %11 {offsets = [8, 32], sizes = [8, 32], strides = [1, 1]} : vector<16x384xf32> to vector<8x32xf32>
    %18 = vector.extract_strided_slice %11 {offsets = [8, 64], sizes = [8, 32], strides = [1, 1]} : vector<16x384xf32> to vector<8x32xf32>
    %19 = vector.extract_strided_slice %11 {offsets = [8, 96], sizes = [8, 32], strides = [1, 1]} : vector<16x384xf32> to vector<8x32xf32>
    %20 = tpu.concatenate %12, %13, %14, %15, %16, %17, %18, %19 in 0 : vector<8x32xf32>, vector<8x32xf32>, vector<8x32xf32>, vector<8x32xf32>, vector<8x32xf32>, vector<8x32xf32>, vector<8x32xf32>, vector<8x32xf32> -> vector<64x32xf32>
    %21 = arith.truncf %20 : vector<64x32xf32> to vector<64x32xbf16>
    %22 = vector.extract_strided_slice %11 {offsets = [0, 128], sizes = [8, 32], strides = [1, 1]} : vector<16x384xf32> to vector<8x32xf32>
    %23 = vector.extract_strided_slice %11 {offsets = [0, 160], sizes = [8, 32], strides = [1, 1]} : vector<16x384xf32> to vector<8x32xf32>
    %24 = vector.extract_strided_slice %11 {offsets = [0, 192], sizes = [8, 32], strides = [1, 1]} : vector<16x384xf32> to vector<8x32xf32>
    %25 = vector.extract_strided_slice %11 {offsets = [0, 224], sizes = [8, 32], strides = [1, 1]} : vector<16x384xf32> to vector<8x32xf32>
    %26 = vector.extract_strided_slice %11 {offsets = [8, 128], sizes = [8, 32], strides = [1, 1]} : vector<16x384xf32> to vector<8x32xf32>
    %27 = vector.extract_strided_slice %11 {offsets = [8, 160], sizes = [8, 32], strides = [1, 1]} : vector<16x384xf32> to vector<8x32xf32>
    %28 = vector.extract_strided_slice %11 {offsets = [8, 192], sizes = [8, 32], strides = [1, 1]} : vector<16x384xf32> to vector<8x32xf32>
    %29 = vector.extract_strided_slice %11 {offsets = [8, 224], sizes = [8, 32], strides = [1, 1]} : vector<16x384xf32> to vector<8x32xf32>
    %30 = tpu.concatenate %22, %23, %24, %25, %26, %27, %28, %29 in 0 : vector<8x32xf32>, vector<8x32xf32>, vector<8x32xf32>, vector<8x32xf32>, vector<8x32xf32>, vector<8x32xf32>, vector<8x32xf32>, vector<8x32xf32> -> vector<64x32xf32>
    %31 = arith.truncf %30 : vector<64x32xf32> to vector<64x32xbf16>
    %32 = vector.extract_strided_slice %11 {offsets = [0, 256], sizes = [8, 32], strides = [1, 1]} : vector<16x384xf32> to vector<8x32xf32>
    %33 = vector.extract_strided_slice %11 {offsets = [0, 288], sizes = [8, 32], strides = [1, 1]} : vector<16x384xf32> to vector<8x32xf32>
    %34 = vector.extract_strided_slice %11 {offsets = [0, 320], sizes = [8, 32], strides = [1, 1]} : vector<16x384xf32> to vector<8x32xf32>
    %35 = vector.extract_strided_slice %11 {offsets = [0, 352], sizes = [8, 32], strides = [1, 1]} : vector<16x384xf32> to vector<8x32xf32>
    %36 = vector.extract_strided_slice %11 {offsets = [8, 256], sizes = [8, 32], strides = [1, 1]} : vector<16x384xf32> to vector<8x32xf32>
    %37 = vector.extract_strided_slice %11 {offsets = [8, 288], sizes = [8, 32], strides = [1, 1]} : vector<16x384xf32> to vector<8x32xf32>
    %38 = vector.extract_strided_slice %11 {offsets = [8, 320], sizes = [8, 32], strides = [1, 1]} : vector<16x384xf32> to vector<8x32xf32>
    %39 = vector.extract_strided_slice %11 {offsets = [8, 352], sizes = [8, 32], strides = [1, 1]} : vector<16x384xf32> to vector<8x32xf32>
    %40 = tpu.concatenate %32, %33, %34, %35, %36, %37, %38, %39 in 0 : vector<8x32xf32>, vector<8x32xf32>, vector<8x32xf32>, vector<8x32xf32>, vector<8x32xf32>, vector<8x32xf32>, vector<8x32xf32>, vector<8x32xf32> -> vector<64x32xf32>
    %41 = arith.truncf %40 : vector<64x32xf32> to vector<64x32xbf16>
    %cst_8 = arith.constant dense<0.000000e+00> : vector<64x64xf32>
    %42 = tpu.matmul %21, %31, %cst_8 {dimension_numbers = #tpu.dot_dimension_numbers<[1], [1], [0], [0], [0, 0, 1, 0], [], []>} : vector<64x32xbf16>, vector<64x32xbf16>, vector<64x64xf32> -> vector<64x64xf32>
    %cst_9 = arith.constant 0.176776692 : f32
    %43 = vector.broadcast %cst_9 : f32 to vector<64x64xf32>
    %44 = arith.mulf %42, %43 : vector<64x64xf32>
    %c0_10 = arith.constant 0 : index
    %c0_11 = arith.constant 0 : index
    %45 = vector.load %arg4[%c0_10, %c0_11] : memref<64x64xf32, #tpu.memory_space<vmem>>, vector<64x64xf32>
    %46 = arith.addf %44, %45 : vector<64x64xf32>
    %cst_12 = arith.constant dense<0xFF800000> : vector<64xf32>
    %47 = vector.multi_reduction <maximumf>, %46, %cst_12 [1] : vector<64x64xf32> to vector<64xf32>
    %48 = vector.shape_cast %47 : vector<64xf32> to vector<64x1xf32>
    %49 = vector.broadcast %48 : vector<64x1xf32> to vector<64x64xf32>
    %50 = arith.subf %46, %49 : vector<64x64xf32>
    %51 = math.exp %50 : vector<64x64xf32>
    %cst_13 = arith.constant dense<0.000000e+00> : vector<64xf32>
    %52 = vector.multi_reduction <add>, %51, %cst_13 [1] : vector<64x64xf32> to vector<64xf32>
    %53 = vector.shape_cast %52 : vector<64xf32> to vector<64x1xf32>
    %54 = tpu.reciprocal %53 {approx = true} : vector<64x1xf32> -> vector<64x1xf32>
    %55 = vector.broadcast %54 : vector<64x1xf32> to vector<64x64xf32>
    %56 = arith.mulf %51, %55 : vector<64x64xf32>
    %57 = arith.truncf %56 : vector<64x64xf32> to vector<64x64xbf16>
    %cst_14 = arith.constant dense<0.000000e+00> : vector<64x32xf32>
    %58 = tpu.matmul %57, %41, %cst_14 {dimension_numbers = #tpu.dot_dimension_numbers<[1], [0], [0], [1], [0, 0, 1, 1], [], []>} : vector<64x64xbf16>, vector<64x32xbf16>, vector<64x32xf32> -> vector<64x32xf32>
    %59 = vector.extract_strided_slice %58 {offsets = [0, 0], sizes = [8, 32], strides = [1, 1]} : vector<64x32xf32> to vector<8x32xf32>
    %60 = vector.extract_strided_slice %58 {offsets = [8, 0], sizes = [8, 32], strides = [1, 1]} : vector<64x32xf32> to vector<8x32xf32>
    %61 = vector.extract_strided_slice %58 {offsets = [16, 0], sizes = [8, 32], strides = [1, 1]} : vector<64x32xf32> to vector<8x32xf32>
    %62 = vector.extract_strided_slice %58 {offsets = [24, 0], sizes = [8, 32], strides = [1, 1]} : vector<64x32xf32> to vector<8x32xf32>
    %63 = tpu.concatenate %59, %60, %61, %62 in 1 : vector<8x32xf32>, vector<8x32xf32>, vector<8x32xf32>, vector<8x32xf32> -> vector<8x128xf32>
    %64 = vector.extract_strided_slice %58 {offsets = [32, 0], sizes = [8, 32], strides = [1, 1]} : vector<64x32xf32> to vector<8x32xf32>
    %65 = vector.extract_strided_slice %58 {offsets = [40, 0], sizes = [8, 32], strides = [1, 1]} : vector<64x32xf32> to vector<8x32xf32>
    %66 = vector.extract_strided_slice %58 {offsets = [48, 0], sizes = [8, 32], strides = [1, 1]} : vector<64x32xf32> to vector<8x32xf32>
    %67 = vector.extract_strided_slice %58 {offsets = [56, 0], sizes = [8, 32], strides = [1, 1]} : vector<64x32xf32> to vector<8x32xf32>
    %68 = tpu.concatenate %64, %65, %66, %67 in 1 : vector<8x32xf32>, vector<8x32xf32>, vector<8x32xf32>, vector<8x32xf32> -> vector<8x128xf32>
    %69 = tpu.concatenate %63, %68 in 0 : vector<8x128xf32>, vector<8x128xf32> -> vector<16x128xf32>
    %c0_15 = arith.constant 0 : index
    %c0_16 = arith.constant 0 : index
    %c0_17 = arith.constant 0 : index
    %70 = vector.load %arg8[%c0_15, %c0_16, %c0_17] : memref<1x1x128xf32, #tpu.memory_space<vmem>>, vector<1x1x128xf32>
    %71 = vector.shape_cast %70 : vector<1x1x128xf32> to vector<1x128xf32>
    %72 = arith.truncf %69 : vector<16x128xf32> to vector<16x128xbf16>
    %c0_18 = arith.constant 0 : index
    %c0_19 = arith.constant 0 : index
    %c0_20 = arith.constant 0 : index
    %73 = vector.load %arg7[%c0_18, %c0_19, %c0_20] : memref<1x128x128xbf16, #tpu.memory_space<vmem>>, vector<1x128x128xbf16>
    %74 = vector.shape_cast %73 : vector<1x128x128xbf16> to vector<128x128xbf16>
    %cst_21 = arith.constant dense<0.000000e+00> : vector<16x128xf32>
    %75 = tpu.matmul %72, %74, %cst_21 {dimension_numbers = #tpu.dot_dimension_numbers<[1], [0], [0], [1], [0, 0, 1, 1], [], []>} : vector<16x128xbf16>, vector<128x128xbf16>, vector<16x128xf32> -> vector<16x128xf32>
    %76 = vector.broadcast %71 : vector<1x128xf32> to vector<16x128xf32>
    %77 = arith.addf %75, %76 : vector<16x128xf32>
    %78 = arith.addf %3, %77 : vector<16x128xf32>
    %c0_22 = arith.constant 0 : index
    %c0_23 = arith.constant 0 : index
    %c0_24 = arith.constant 0 : index
    %79 = vector.load %arg9[%c0_22, %c0_23, %c0_24] : memref<1x1x128xf32, #tpu.memory_space<vmem>>, vector<1x1x128xf32>
    %80 = vector.shape_cast %79 : vector<1x1x128xf32> to vector<1x128xf32>
    %c0_25 = arith.constant 0 : index
    %c0_26 = arith.constant 0 : index
    %c0_27 = arith.constant 0 : index
    %81 = vector.load %arg10[%c0_25, %c0_26, %c0_27] : memref<1x1x128xf32, #tpu.memory_space<vmem>>, vector<1x1x128xf32>
    %82 = vector.shape_cast %81 : vector<1x1x128xf32> to vector<1x128xf32>
    %cst_28 = arith.constant dense<0.000000e+00> : vector<16xf32>
    %83 = vector.multi_reduction <add>, %78, %cst_28 [1] : vector<16x128xf32> to vector<16xf32>
    %84 = vector.shape_cast %83 : vector<16xf32> to vector<16x1xf32>
    %cst_29 = arith.constant 1.280000e+02 : f32
    %85 = vector.broadcast %cst_29 : f32 to vector<16x1xf32>
    %86 = arith.divf %84, %85 : vector<16x1xf32>
    %87 = vector.broadcast %86 : vector<16x1xf32> to vector<16x128xf32>
    %88 = arith.subf %78, %87 : vector<16x128xf32>
    %89 = arith.mulf %88, %88 : vector<16x128xf32>
    %cst_30 = arith.constant dense<0.000000e+00> : vector<16xf32>
    %90 = vector.multi_reduction <add>, %89, %cst_30 [1] : vector<16x128xf32> to vector<16xf32>
    %91 = vector.shape_cast %90 : vector<16xf32> to vector<16x1xf32>
    %cst_31 = arith.constant 1.280000e+02 : f32
    %92 = vector.broadcast %cst_31 : f32 to vector<16x1xf32>
    %93 = arith.divf %91, %92 : vector<16x1xf32>
    %94 = vector.broadcast %86 : vector<16x1xf32> to vector<16x128xf32>
    %95 = arith.subf %78, %94 : vector<16x128xf32>
    %cst_32 = arith.constant 9.99999996E-13 : f32
    %96 = vector.broadcast %cst_32 : f32 to vector<16x1xf32>
    %97 = arith.addf %93, %96 : vector<16x1xf32>
    %98 = math.rsqrt %97 : vector<16x1xf32>
    %99 = vector.broadcast %98 : vector<16x1xf32> to vector<16x128xf32>
    %100 = arith.mulf %95, %99 : vector<16x128xf32>
    %101 = vector.broadcast %80 : vector<1x128xf32> to vector<16x128xf32>
    %102 = arith.mulf %100, %101 : vector<16x128xf32>
    %103 = vector.broadcast %82 : vector<1x128xf32> to vector<16x128xf32>
    %104 = arith.addf %102, %103 : vector<16x128xf32>
    %c0_33 = arith.constant 0 : index
    %c0_34 = arith.constant 0 : index
    %c0_35 = arith.constant 0 : index
    %105 = vector.load %arg12[%c0_33, %c0_34, %c0_35] : memref<1x1x256xf32, #tpu.memory_space<vmem>>, vector<1x1x256xf32>
    %106 = vector.shape_cast %105 : vector<1x1x256xf32> to vector<1x256xf32>
    %107 = arith.truncf %104 : vector<16x128xf32> to vector<16x128xbf16>
    %c0_36 = arith.constant 0 : index
    %c0_37 = arith.constant 0 : index
    %c0_38 = arith.constant 0 : index
    %108 = vector.load %arg11[%c0_36, %c0_37, %c0_38] : memref<1x128x256xbf16, #tpu.memory_space<vmem>>, vector<1x128x256xbf16>
    %109 = vector.shape_cast %108 : vector<1x128x256xbf16> to vector<128x256xbf16>
    %cst_39 = arith.constant dense<0.000000e+00> : vector<16x256xf32>
    %110 = tpu.matmul %107, %109, %cst_39 {dimension_numbers = #tpu.dot_dimension_numbers<[1], [0], [0], [1], [0, 0, 1, 1], [], []>} : vector<16x128xbf16>, vector<128x256xbf16>, vector<16x256xf32> -> vector<16x256xf32>
    %111 = vector.broadcast %106 : vector<1x256xf32> to vector<16x256xf32>
    %112 = arith.addf %110, %111 : vector<16x256xf32>
    %cst_40 = arith.constant 5.000000e-01 : f32
    %113 = vector.broadcast %cst_40 : f32 to vector<16x256xf32>
    %114 = arith.mulf %113, %112 : vector<16x256xf32>
    %cst_41 = arith.constant 4.471500e-02 : f32
    %115 = vector.broadcast %cst_41 : f32 to vector<16x256xf32>
    %116 = arith.mulf %115, %112 : vector<16x256xf32>
    %117 = arith.mulf %116, %112 : vector<16x256xf32>
    %118 = arith.mulf %117, %112 : vector<16x256xf32>
    %119 = arith.addf %112, %118 : vector<16x256xf32>
    %cst_42 = arith.constant 0.797884583 : f32
    %120 = vector.broadcast %cst_42 : f32 to vector<16x256xf32>
    %121 = arith.mulf %120, %119 : vector<16x256xf32>
    %122 = math.tanh %121 : vector<16x256xf32>
    %cst_43 = arith.constant 1.000000e+00 : f32
    %123 = vector.broadcast %cst_43 : f32 to vector<16x256xf32>
    %124 = arith.addf %123, %122 : vector<16x256xf32>
    %125 = arith.mulf %114, %124 : vector<16x256xf32>
    %c0_44 = arith.constant 0 : index
    %c0_45 = arith.constant 0 : index
    %c0_46 = arith.constant 0 : index
    %126 = vector.load %arg14[%c0_44, %c0_45, %c0_46] : memref<1x1x128xf32, #tpu.memory_space<vmem>>, vector<1x1x128xf32>
    %127 = vector.shape_cast %126 : vector<1x1x128xf32> to vector<1x128xf32>
    %128 = arith.truncf %125 : vector<16x256xf32> to vector<16x256xbf16>
    %c0_47 = arith.constant 0 : index
    %c0_48 = arith.constant 0 : index
    %c0_49 = arith.constant 0 : index
    %129 = vector.load %arg13[%c0_47, %c0_48, %c0_49] : memref<1x256x128xbf16, #tpu.memory_space<vmem>>, vector<1x256x128xbf16>
    %130 = vector.shape_cast %129 : vector<1x256x128xbf16> to vector<256x128xbf16>
    %cst_50 = arith.constant dense<0.000000e+00> : vector<16x128xf32>
    %131 = tpu.matmul %128, %130, %cst_50 {dimension_numbers = #tpu.dot_dimension_numbers<[1], [0], [0], [1], [0, 0, 1, 1], [], []>} : vector<16x256xbf16>, vector<256x128xbf16>, vector<16x128xf32> -> vector<16x128xf32>
    %132 = vector.broadcast %127 : vector<1x128xf32> to vector<16x128xf32>
    %133 = arith.addf %131, %132 : vector<16x128xf32>
    %134 = arith.addf %104, %133 : vector<16x128xf32>
    %c0_51 = arith.constant 0 : index
    %c0_52 = arith.constant 0 : index
    %c0_53 = arith.constant 0 : index
    %135 = vector.load %arg15[%c0_51, %c0_52, %c0_53] : memref<1x1x128xf32, #tpu.memory_space<vmem>>, vector<1x1x128xf32>
    %136 = vector.shape_cast %135 : vector<1x1x128xf32> to vector<1x128xf32>
    %c0_54 = arith.constant 0 : index
    %c0_55 = arith.constant 0 : index
    %c0_56 = arith.constant 0 : index
    %137 = vector.load %arg16[%c0_54, %c0_55, %c0_56] : memref<1x1x128xf32, #tpu.memory_space<vmem>>, vector<1x1x128xf32>
    %138 = vector.shape_cast %137 : vector<1x1x128xf32> to vector<1x128xf32>
    %cst_57 = arith.constant dense<0.000000e+00> : vector<16xf32>
    %139 = vector.multi_reduction <add>, %134, %cst_57 [1] : vector<16x128xf32> to vector<16xf32>
    %140 = vector.shape_cast %139 : vector<16xf32> to vector<16x1xf32>
    %cst_58 = arith.constant 1.280000e+02 : f32
    %141 = vector.broadcast %cst_58 : f32 to vector<16x1xf32>
    %142 = arith.divf %140, %141 : vector<16x1xf32>
    %143 = vector.broadcast %142 : vector<16x1xf32> to vector<16x128xf32>
    %144 = arith.subf %134, %143 : vector<16x128xf32>
    %145 = arith.mulf %144, %144 : vector<16x128xf32>
    %cst_59 = arith.constant dense<0.000000e+00> : vector<16xf32>
    %146 = vector.multi_reduction <add>, %145, %cst_59 [1] : vector<16x128xf32> to vector<16xf32>
    %147 = vector.shape_cast %146 : vector<16xf32> to vector<16x1xf32>
    %cst_60 = arith.constant 1.280000e+02 : f32
    %148 = vector.broadcast %cst_60 : f32 to vector<16x1xf32>
    %149 = arith.divf %147, %148 : vector<16x1xf32>
    %150 = vector.broadcast %142 : vector<16x1xf32> to vector<16x128xf32>
    %151 = arith.subf %134, %150 : vector<16x128xf32>
    %cst_61 = arith.constant 9.99999996E-13 : f32
    %152 = vector.broadcast %cst_61 : f32 to vector<16x1xf32>
    %153 = arith.addf %149, %152 : vector<16x1xf32>
    %154 = math.rsqrt %153 : vector<16x1xf32>
    %155 = vector.broadcast %154 : vector<16x1xf32> to vector<16x128xf32>
    %156 = arith.mulf %151, %155 : vector<16x128xf32>
    %157 = vector.broadcast %136 : vector<1x128xf32> to vector<16x128xf32>
    %158 = arith.mulf %156, %157 : vector<16x128xf32>
    %159 = vector.broadcast %138 : vector<1x128xf32> to vector<16x128xf32>
    %160 = arith.addf %158, %159 : vector<16x128xf32>
    %c0_62 = arith.constant 0 : index
    %c0_63 = arith.constant 0 : index
    %161 = vector.load %arg22[%c0_62, %c0_63] : memref<16x128xf32, #tpu.memory_space<vmem>>, vector<16x128xf32>
    tpu.vector_store %arg22[%c0_62, %c0_63], %160 {strides = array<i32>} : memref<16x128xf32, #tpu.memory_space<vmem>>, vector<16x128xf32>,
    %c1_i32 = arith.constant 1 : i32
    %162 = arith.cmpi eq, %arg0, %c1_i32 : i32
    %163 = arith.extui %162 : i1 to i32
    %c0_i32_64 = arith.constant 0 : i32
    %164 = arith.cmpi ne, %163, %c0_i32_64 : i32
    scf.if %164 {
      %165 = vector.extract_strided_slice %160 {offsets = [0, 0], sizes = [1, 128], strides = [1, 1]} : vector<16x128xf32> to vector<1x128xf32>
      %166 = vector.extract_strided_slice %160 {offsets = [8, 0], sizes = [1, 128], strides = [1, 1]} : vector<16x128xf32> to vector<1x128xf32>
      %167 = tpu.concatenate %165, %166 in 0 : vector<1x128xf32>, vector<1x128xf32> -> vector<2x128xf32>
      %c0_65 = arith.constant 0 : index
      %c0_66 = arith.constant 0 : index
      %168 = vector.load %arg18[%c0_65, %c0_66] : memref<1x128xf32, #tpu.memory_space<vmem>>, vector<1x128xf32>
      %169 = arith.truncf %167 : vector<2x128xf32> to vector<2x128xbf16>
      %c0_67 = arith.constant 0 : index
      %c0_68 = arith.constant 0 : index
      %170 = vector.load %arg17[%c0_67, %c0_68] : memref<128x128xbf16, #tpu.memory_space<vmem>>, vector<128x128xbf16>
      %cst_69 = arith.constant dense<0.000000e+00> : vector<2x128xf32>
      %171 = tpu.matmul %169, %170, %cst_69 {dimension_numbers = #tpu.dot_dimension_numbers<[1], [0], [0], [1], [0, 0, 1, 1], [], []>} : vector<2x128xbf16>, vector<128x128xbf16>, vector<2x128xf32> -> vector<2x128xf32>
      %172 = vector.broadcast %168 : vector<1x128xf32> to vector<2x128xf32>
      %173 = arith.addf %171, %172 : vector<2x128xf32>
      %174 = math.tanh %173 : vector<2x128xf32>
      %c0_70 = arith.constant 0 : index
      %c0_71 = arith.constant 0 : index
      %175 = vector.load %arg20[%c0_70, %c0_71] : memref<1x128xf32, #tpu.memory_space<vmem>>, vector<1x128xf32>
      %176 = arith.truncf %174 : vector<2x128xf32> to vector<2x128xbf16>
      %c0_72 = arith.constant 0 : index
      %c0_73 = arith.constant 0 : index
      %177 = vector.load %arg19[%c0_72, %c0_73] : memref<128x128xbf16, #tpu.memory_space<vmem>>, vector<128x128xbf16>
      %cst_74 = arith.constant dense<0.000000e+00> : vector<2x128xf32>
      %178 = tpu.matmul %176, %177, %cst_74 {dimension_numbers = #tpu.dot_dimension_numbers<[1], [0], [0], [1], [0, 0, 1, 1], [], []>} : vector<2x128xbf16>, vector<128x128xbf16>, vector<2x128xf32> -> vector<2x128xf32>
      %179 = vector.broadcast %175 : vector<1x128xf32> to vector<2x128xf32>
      %180 = arith.addf %178, %179 : vector<2x128xf32>
      %c0_75 = arith.constant 0 : index
      %c0_76 = arith.constant 0 : index
      %181 = vector.load %arg21[%c0_75, %c0_76] : memref<2x128xf32, #tpu.memory_space<vmem>>, vector<2x128xf32>
      tpu.vector_store %arg21[%c0_75, %c0_76], %180 {strides = array<i32>} : memref<2x128xf32, #tpu.memory_space<vmem>>, vector<2x128xf32>,
    } else {
    }
    return
  }
  func.func @transform_0(%arg0: i32) -> (i32, i32) {
    %c0_i32 = arith.constant 0 : i32
    %c0_i32_0 = arith.constant 0 : i32
    %c0_i32_1 = arith.constant 0 : i32
    return %c0_i32, %c0_i32_0 : i32, i32
  }
  func.func @transform_1(%arg0: i32) -> (i32, i32) {
    %c0_i32 = arith.constant 0 : i32
    %c0_i32_0 = arith.constant 0 : i32
    %c0_i32_1 = arith.constant 0 : i32
    return %c0_i32, %c0_i32_0 : i32, i32
  }
  func.func @transform_2(%arg0: i32) -> (i32, i32) {
    %c0_i32 = arith.constant 0 : i32
    %c0_i32_0 = arith.constant 0 : i32
    %c0_i32_1 = arith.constant 0 : i32
    return %c0_i32, %c0_i32_0 : i32, i32
  }
  func.func @transform_3(%arg0: i32) -> (i32, i32) {
    %c0_i32 = arith.constant 0 : i32
    %c0_i32_0 = arith.constant 0 : i32
    %c0_i32_1 = arith.constant 0 : i32
    return %c0_i32, %c0_i32_0 : i32, i32
  }
  func.func @transform_4(%arg0: i32) -> (i32, i32, i32) {
    %c0_i32 = arith.constant 0 : i32
    %c0_i32_0 = arith.constant 0 : i32
    %c0_i32_1 = arith.constant 0 : i32
    return %arg0, %c0_i32, %c0_i32_0 : i32, i32, i32
  }
  func.func @transform_5(%arg0: i32) -> (i32, i32, i32) {
    %c0_i32 = arith.constant 0 : i32
    %c0_i32_0 = arith.constant 0 : i32
    %c0_i32_1 = arith.constant 0 : i32
    return %arg0, %c0_i32, %c0_i32_0 : i32, i32, i32
  }
  func.func @transform_6(%arg0: i32) -> (i32, i32, i32) {
    %c0_i32 = arith.constant 0 : i32
    %c0_i32_0 = arith.constant 0 : i32
    %c0_i32_1 = arith.constant 0 : i32
    return %arg0, %c0_i32, %c0_i32_0 : i32, i32, i32
  }
  func.func @transform_7(%arg0: i32) -> (i32, i32, i32) {
    %c0_i32 = arith.constant 0 : i32
    %c0_i32_0 = arith.constant 0 : i32
    %c0_i32_1 = arith.constant 0 : i32
    return %arg0, %c0_i32, %c0_i32_0 : i32, i32, i32
  }
  func.func @transform_8(%arg0: i32) -> (i32, i32, i32) {
    %c0_i32 = arith.constant 0 : i32
    %c0_i32_0 = arith.constant 0 : i32
    %c0_i32_1 = arith.constant 0 : i32
    return %arg0, %c0_i32, %c0_i32_0 : i32, i32, i32
  }
  func.func @transform_9(%arg0: i32) -> (i32, i32, i32) {
    %c0_i32 = arith.constant 0 : i32
    %c0_i32_0 = arith.constant 0 : i32
    %c0_i32_1 = arith.constant 0 : i32
    return %arg0, %c0_i32, %c0_i32_0 : i32, i32, i32
  }
  func.func @transform_10(%arg0: i32) -> (i32, i32, i32) {
    %c0_i32 = arith.constant 0 : i32
    %c0_i32_0 = arith.constant 0 : i32
    %c0_i32_1 = arith.constant 0 : i32
    return %arg0, %c0_i32, %c0_i32_0 : i32, i32, i32
  }
  func.func @transform_11(%arg0: i32) -> (i32, i32, i32) {
    %c0_i32 = arith.constant 0 : i32
    %c0_i32_0 = arith.constant 0 : i32
    %c0_i32_1 = arith.constant 0 : i32
    return %arg0, %c0_i32, %c0_i32_0 : i32, i32, i32
  }
  func.func @transform_12(%arg0: i32) -> (i32, i32, i32) {
    %c0_i32 = arith.constant 0 : i32
    %c0_i32_0 = arith.constant 0 : i32
    %c0_i32_1 = arith.constant 0 : i32
    return %arg0, %c0_i32, %c0_i32_0 : i32, i32, i32
  }
  func.func @transform_13(%arg0: i32) -> (i32, i32, i32) {
    %c0_i32 = arith.constant 0 : i32
    %c0_i32_0 = arith.constant 0 : i32
    %c0_i32_1 = arith.constant 0 : i32
    return %arg0, %c0_i32, %c0_i32_0 : i32, i32, i32
  }
  func.func @transform_14(%arg0: i32) -> (i32, i32, i32) {
    %c0_i32 = arith.constant 0 : i32
    %c0_i32_0 = arith.constant 0 : i32
    %c0_i32_1 = arith.constant 0 : i32
    return %arg0, %c0_i32, %c0_i32_0 : i32, i32, i32
  }
  func.func @transform_15(%arg0: i32) -> (i32, i32, i32) {
    %c0_i32 = arith.constant 0 : i32
    %c0_i32_0 = arith.constant 0 : i32
    %c0_i32_1 = arith.constant 0 : i32
    return %arg0, %c0_i32, %c0_i32_0 : i32, i32, i32
  }
  func.func @transform_16(%arg0: i32) -> (i32, i32) {
    %c0_i32 = arith.constant 0 : i32
    %c0_i32_0 = arith.constant 0 : i32
    %c0_i32_1 = arith.constant 0 : i32
    return %c0_i32, %c0_i32_0 : i32, i32
  }
  func.func @transform_17(%arg0: i32) -> (i32, i32) {
    %c0_i32 = arith.constant 0 : i32
    %c0_i32_0 = arith.constant 0 : i32
    %c0_i32_1 = arith.constant 0 : i32
    return %c0_i32, %c0_i32_0 : i32, i32
  }
  func.func @transform_18(%arg0: i32) -> (i32, i32) {
    %c0_i32 = arith.constant 0 : i32
    %c0_i32_0 = arith.constant 0 : i32
    %c0_i32_1 = arith.constant 0 : i32
    return %c0_i32, %c0_i32_0 : i32, i32
  }
  func.func @transform_19(%arg0: i32) -> (i32, i32) {
    %c0_i32 = arith.constant 0 : i32
    %c0_i32_0 = arith.constant 0 : i32
    %c0_i32_1 = arith.constant 0 : i32
    return %c0_i32, %c0_i32_0 : i32, i32
  }
  func.func @transform_20(%arg0: i32) -> (i32, i32) {
    %c0_i32 = arith.constant 0 : i32
    %c0_i32_0 = arith.constant 0 : i32
    %c0_i32_1 = arith.constant 0 : i32
    return %c0_i32, %c0_i32_0 : i32, i32
  }
}

</mosaic_0001>

<llo_original>
// kernel: bert_class_forward.1
$region0: #{bert_class_forward.1}
  #allocation0 [shape = 'u32[]', space=smem, size = 0x4, offset = 0x4, fixed_abs, tag = 'smem constant byte address 0x4 - core index']
  #allocation1 [shape = 'u32[144,128]{1,0:T(1,128)}', space=vmem, size = 0x12000, scoped, tag = 'internal scratch']
  #allocation2 [shape = 'f32[16,128]{1,0:T(8,128)}', space=vmem, size = 0x2000, scoped, tag = 'scratch operand']
  %s0 = inlined_call_operand.vmem [shape: f32[16,128], index: 0, kind: input, shape index: {}]
  %s1 = inlined_call_operand.vmem [shape: f32[1,128], index: 1, kind: input, shape index: {}]
  %s2 = inlined_call_operand.vmem [shape: f32[1,128], index: 2, kind: input, shape index: {}]
  %s3 = inlined_call_operand.vmem [shape: f32[64,64], index: 3, kind: input, shape index: {}]
  %s4 = inlined_call_operand.vmem [shape: bf16[2,128,384], index: 4, kind: input, shape index: {}]
  %s5 = inlined_call_operand.vmem [shape: f32[2,1,384], index: 5, kind: input, shape index: {}]
  %s6 = inlined_call_operand.vmem [shape: bf16[2,128,128], index: 6, kind: input, shape index: {}]
  %s7 = inlined_call_operand.vmem [shape: f32[2,1,128], index: 7, kind: input, shape index: {}]
  %s8 = inlined_call_operand.vmem [shape: f32[2,1,128], index: 8, kind: input, shape index: {}]
  %s9 = inlined_call_operand.vmem [shape: f32[2,1,128], index: 9, kind: input, shape index: {}]
  %s10 = inlined_call_operand.vmem [shape: bf16[2,128,256], index: 10, kind: input, shape index: {}]
  %s11 = inlined_call_operand.vmem [shape: f32[2,1,256], index: 11, kind: input, shape index: {}]
  %s12 = inlined_call_operand.vmem [shape: bf16[2,256,128], index: 12, kind: input, shape index: {}]
  %s13 = inlined_call_operand.vmem [shape: f32[2,1,128], index: 13, kind: input, shape index: {}]
  %s14 = inlined_call_operand.vmem [shape: f32[2,1,128], index: 14, kind: input, shape index: {}]
  %s15 = inlined_call_operand.vmem [shape: f32[2,1,128], index: 15, kind: input, shape index: {}]
  %s16 = inlined_call_operand.vmem [shape: bf16[128,128], index: 16, kind: input, shape index: {}]
  %s17 = inlined_call_operand.vmem [shape: f32[1,128], index: 17, kind: input, shape index: {}]
  %s18 = inlined_call_operand.vmem [shape: bf16[128,128], index: 18, kind: input, shape index: {}]
  %s19 = inlined_call_operand.vmem [shape: f32[1,128], index: 19, kind: input, shape index: {}]
  %s20 = inlined_call_operand.hbm [shape: f32[2,128], index: 20, kind: output, shape index: {}]
  %s21 = sld [smem:[#allocation0]]
  $region121: #{bert_class_forward.1} parent=0
    _
  %s23 = ssub.s32 1, %s21
  %s24 = scalar_select 0, %s23, %s21
  $region1: #{bert_class_forward.1} parent=0
    #allocation3 [shape = 'u8[1024]{0}', space=vmem, size = 0x400, scoped, tag = 'output window, operand 0, single buffered']
    #allocation4 [shape = 's32[2]{0}', space=sflag, size = 0x8, scoped, tag = 'scoped memory for bert_class_forward.1']
    %25 = vsyncpa [#allocation4], 0
    loop: start=0, step=1, limit=4
    $region2: #{bert_class_forward.1} parent=1 // loop_pre_header
      _
    $region3: #{bert_class_forward.1} parent=1 // loop_header
      %s27 = sphi 0, %s31
      %p28 = scmp.ge.s32.totalorder %s27, 4
      %s35 = sphi 0, %s35
      %s37 = sphi 0, %s35
      %s38 = sphi 0, %s37
      %s52 = sphi 0, %s38
      %s56 = sphi 0, %s56
      %s58 = sphi 0, %s56
      %s59 = sphi 0, %s58
      %s73 = sphi 0, %s59
      %s77 = sphi 0, %s77
      %s79 = sphi 0, %s77
      %s80 = sphi 0, %s79
      %s94 = sphi 0, %s80
      %s98 = sphi 0, %s98
      %s100 = sphi 0, %s98
      %s101 = sphi 0, %s100
      %s115 = sphi 0, %s101
      %s121 = sphi 0, %s123
      %s124 = sphi 0, %s121
      %s125 = sphi 0, %s124
      %s141 = sphi 0, %s125
      %s147 = sphi 0, %s149
      %s150 = sphi 0, %s147
      %s151 = sphi 0, %s150
      %s167 = sphi 0, %s151
      %s173 = sphi 0, %s175
      %s176 = sphi 0, %s173
      %s177 = sphi 0, %s176
      %s193 = sphi 0, %s177
      %s199 = sphi 0, %s201
      %s202 = sphi 0, %s199
      %s203 = sphi 0, %s202
      %s219 = sphi 0, %s203
      %s225 = sphi 0, %s227
      %s228 = sphi 0, %s225
      %s229 = sphi 0, %s228
      %s245 = sphi 0, %s229
      %s251 = sphi 0, %s253
      %s254 = sphi 0, %s251
      %s255 = sphi 0, %s254
      %s271 = sphi 0, %s255
      %s277 = sphi 0, %s279
      %s280 = sphi 0, %s277
      %s281 = sphi 0, %s280
      %s297 = sphi 0, %s281
      %s303 = sphi 0, %s305
      %s306 = sphi 0, %s303
      %s307 = sphi 0, %s306
      %s323 = sphi 0, %s307
      %s329 = sphi 0, %s331
      %s332 = sphi 0, %s329
      %s333 = sphi 0, %s332
      %s349 = sphi 0, %s333
      %s355 = sphi 0, %s357
      %s358 = sphi 0, %s355
      %s359 = sphi 0, %s358
      %s375 = sphi 0, %s359
      %s381 = sphi 0, %s383
      %s384 = sphi 0, %s381
      %s385 = sphi 0, %s384
      %s401 = sphi 0, %s385
      %s407 = sphi 0, %s409
      %s410 = sphi 0, %s407
      %s411 = sphi 0, %s410
      %s427 = sphi 0, %s411
      %s431 = sphi 0, %s431
      %s433 = sphi 0, %s431
      %s434 = sphi 0, %s433
      %s448 = sphi 0, %s434
      %s452 = sphi 0, %s452
      %s454 = sphi 0, %s452
      %s455 = sphi 0, %s454
      %s469 = sphi 0, %s455
      %s473 = sphi 0, %s473
      %s475 = sphi 0, %s473
      %s476 = sphi 0, %s475
      %s490 = sphi 0, %s476
      %s494 = sphi 0, %s494
      %s496 = sphi 0, %s494
      %s497 = sphi 0, %s496
      %s511 = sphi 0, %s497
      %s515 = sphi 0, %s515
      %s517 = sphi 0, %s515
      %s518 = sphi 0, %s517
      %s532 = sphi 0, %s518
    $region4: #{bert_class_forward.1} parent=1 // loop_header_branch
      %30 = sbr.rel (%p28) target = $region8
    $region5: #{bert_class_forward.1} parent=1 // loop_body
      %s32 = ssub.s32 %s27, 1
      %s33 = ssub.s32 %s27, 2
      %s34 = sadd.s32 %s27, 1
      %s36 = sadd.s32 %s35, 1
      %p39 = scmp.eq.s32.totalorder %s27, 1
      %p40 = scmp.ne.s32.totalorder %s35, %s37
      %p41 = scmp.eq.s32.totalorder %s27, 0
      %p42 = por %p40, %p41
      %p43 = scmp.ne.s32.totalorder %s35, %s37
      %p44 = scmp.eq.s32.totalorder %s32, 1
      %p45 = por %p43, %p44
      %p46 = scmp.ne.s32.totalorder %s37, %s38
      %p47 = scmp.eq.s32.totalorder %s32, 0
      %p48 = por %p46, %p47
      %p49 = scmp.ne.s32.totalorder %s37, %s38
      %p50 = scmp.eq.s32.totalorder %s33, 1
      %p51 = por %p49, %p50
      %p53 = scmp.ne.s32.totalorder %s38, %s52
      %p54 = scmp.eq.s32.totalorder %s33, 0
      %p55 = por %p53, %p54
      %s57 = sadd.s32 %s56, 1
      %p60 = scmp.eq.s32.totalorder %s27, 1
      %p61 = scmp.ne.s32.totalorder %s56, %s58
      %p62 = scmp.eq.s32.totalorder %s27, 0
      %p63 = por %p61, %p62
      %p64 = scmp.ne.s32.totalorder %s56, %s58
      %p65 = scmp.eq.s32.totalorder %s32, 1
      %p66 = por %p64, %p65
      %p67 = scmp.ne.s32.totalorder %s58, %s59
      %p68 = scmp.eq.s32.totalorder %s32, 0
      %p69 = por %p67, %p68
      %p70 = scmp.ne.s32.totalorder %s58, %s59
      %p71 = scmp.eq.s32.totalorder %s33, 1
      %p72 = por %p70, %p71
      %p74 = scmp.ne.s32.totalorder %s59, %s73
      %p75 = scmp.eq.s32.totalorder %s33, 0
      %p76 = por %p74, %p75
      %s78 = sadd.s32 %s77, 1
      %p81 = scmp.eq.s32.totalorder %s27, 1
      %p82 = scmp.ne.s32.totalorder %s77, %s79
      %p83 = scmp.eq.s32.totalorder %s27, 0
      %p84 = por %p82, %p83
      %p85 = scmp.ne.s32.totalorder %s77, %s79
      %p86 = scmp.eq.s32.totalorder %s32, 1
      %p87 = por %p85, %p86
      %p88 = scmp.ne.s32.totalorder %s79, %s80
      %p89 = scmp.eq.s32.totalorder %s32, 0
      %p90 = por %p88, %p89
      %p91 = scmp.ne.s32.totalorder %s79, %s80
      %p92 = scmp.eq.s32.totalorder %s33, 1
      %p93 = por %p91, %p92
      %p95 = scmp.ne.s32.totalorder %s80, %s94
      %p96 = scmp.eq.s32.totalorder %s33, 0
      %p97 = por %p95, %p96
      %s99 = sadd.s32 %s98, 1
      %p102 = scmp.eq.s32.totalorder %s27, 1
      %p103 = scmp.ne.s32.totalorder %s98, %s100
      %p104 = scmp.eq.s32.totalorder %s27, 0
      %p105 = por %p103, %p104
      %p106 = scmp.ne.s32.totalorder %s98, %s100
      %p107 = scmp.eq.s32.totalorder %s32, 1
      %p108 = por %p106, %p107
      %p109 = scmp.ne.s32.totalorder %s100, %s101
      %p110 = scmp.eq.s32.totalorder %s32, 0
      %p111 = por %p109, %p110
      %p112 = scmp.ne.s32.totalorder %s100, %s101
      %p113 = scmp.eq.s32.totalorder %s33, 1
      %p114 = por %p112, %p113
      %p116 = scmp.ne.s32.totalorder %s101, %s115
      %p117 = scmp.eq.s32.totalorder %s33, 0
      %p118 = por %p116, %p117
      %s119 = ssub.s32 %s27, %s34
      %p120 = scmp.eq.s32.totalorder %s119, 0
      %s122 = sadd.s32 %s121, 1
      %s123 = scalar_select %p120, %s121, %s122
      %p126 = pneg %p120
      %p127 = scmp.eq.s32.totalorder %s27, 1
      %p128 = por %p126, %p127
      %p129 = scmp.ne.s32.totalorder %s121, %s124
      %p130 = scmp.eq.s32.totalorder %s27, 0
      %p131 = por %p129, %p130
      %p132 = scmp.ne.s32.totalorder %s121, %s124
      %p133 = scmp.eq.s32.totalorder %s32, 1
      %p134 = por %p132, %p133
      %p135 = scmp.ne.s32.totalorder %s124, %s125
      %p136 = scmp.eq.s32.totalorder %s32, 0
      %p137 = por %p135, %p136
      %p138 = scmp.ne.s32.totalorder %s124, %s125
      %p139 = scmp.eq.s32.totalorder %s33, 1
      %p140 = por %p138, %p139
      %p142 = scmp.ne.s32.totalorder %s125, %s141
      %p143 = scmp.eq.s32.totalorder %s33, 0
      %p144 = por %p142, %p143
      %s145 = ssub.s32 %s27, %s34
      %p146 = scmp.eq.s32.totalorder %s145, 0
      %s148 = sadd.s32 %s147, 1
      %s149 = scalar_select %p146, %s147, %s148
      %p152 = pneg %p146
      %p153 = scmp.eq.s32.totalorder %s27, 1
      %p154 = por %p152, %p153
      %p155 = scmp.ne.s32.totalorder %s147, %s150
      %p156 = scmp.eq.s32.totalorder %s27, 0
      %p157 = por %p155, %p156
      %p158 = scmp.ne.s32.totalorder %s147, %s150
      %p159 = scmp.eq.s32.totalorder %s32, 1
      %p160 = por %p158, %p159
      %p161 = scmp.ne.s32.totalorder %s150, %s151
      %p162 = scmp.eq.s32.totalorder %s32, 0
      %p163 = por %p161, %p162
      %p164 = scmp.ne.s32.totalorder %s150, %s151
      %p165 = scmp.eq.s32.totalorder %s33, 1
      %p166 = por %p164, %p165
      %p168 = scmp.ne.s32.totalorder %s151, %s167
      %p169 = scmp.eq.s32.totalorder %s33, 0
      %p170 = por %p168, %p169
      %s171 = ssub.s32 %s27, %s34
      %p172 = scmp.eq.s32.totalorder %s171, 0
      %s174 = sadd.s32 %s173, 1
      %s175 = scalar_select %p172, %s173, %s174
      %p178 = pneg %p172
      %p179 = scmp.eq.s32.totalorder %s27, 1
      %p180 = por %p178, %p179
      %p181 = scmp.ne.s32.totalorder %s173, %s176
      %p182 = scmp.eq.s32.totalorder %s27, 0
      %p183 = por %p181, %p182
      %p184 = scmp.ne.s32.totalorder %s173, %s176
      %p185 = scmp.eq.s32.totalorder %s32, 1
      %p186 = por %p184, %p185
      %p187 = scmp.ne.s32.totalorder %s176, %s177
      %p188 = scmp.eq.s32.totalorder %s32, 0
      %p189 = por %p187, %p188
      %p190 = scmp.ne.s32.totalorder %s176, %s177
      %p191 = scmp.eq.s32.totalorder %s33, 1
      %p192 = por %p190, %p191
      %p194 = scmp.ne.s32.totalorder %s177, %s193
      %p195 = scmp.eq.s32.totalorder %s33, 0
      %p196 = por %p194, %p195
      %s197 = ssub.s32 %s27, %s34
      %p198 = scmp.eq.s32.totalorder %s197, 0
      %s200 = sadd.s32 %s199, 1
      %s201 = scalar_select %p198, %s199, %s200
      %p204 = pneg %p198
      %p205 = scmp.eq.s32.totalorder %s27, 1
      %p206 = por %p204, %p205
      %p207 = scmp.ne.s32.totalorder %s199, %s202
      %p208 = scmp.eq.s32.totalorder %s27, 0
      %p209 = por %p207, %p208
      %p210 = scmp.ne.s32.totalorder %s199, %s202
      %p211 = scmp.eq.s32.totalorder %s32, 1
      %p212 = por %p210, %p211
      %p213 = scmp.ne.s32.totalorder %s202, %s203
      %p214 = scmp.eq.s32.totalorder %s32, 0
      %p215 = por %p213, %p214
      %p216 = scmp.ne.s32.totalorder %s202, %s203
      %p217 = scmp.eq.s32.totalorder %s33, 1
      %p218 = por %p216, %p217
      %p220 = scmp.ne.s32.totalorder %s203, %s219
      %p221 = scmp.eq.s32.totalorder %s33, 0
      %p222 = por %p220, %p221
      %s223 = ssub.s32 %s27, %s34
      %p224 = scmp.eq.s32.totalorder %s223, 0
      %s226 = sadd.s32 %s225, 1
      %s227 = scalar_select %p224, %s225, %s226
      %p230 = pneg %p224
      %p231 = scmp.eq.s32.totalorder %s27, 1
      %p232 = por %p230, %p231
      %p233 = scmp.ne.s32.totalorder %s225, %s228
      %p234 = scmp.eq.s32.totalorder %s27, 0
      %p235 = por %p233, %p234
      %p236 = scmp.ne.s32.totalorder %s225, %s228
      %p237 = scmp.eq.s32.totalorder %s32, 1
      %p238 = por %p236, %p237
      %p239 = scmp.ne.s32.totalorder %s228, %s229
      %p240 = scmp.eq.s32.totalorder %s32, 0
      %p241 = por %p239, %p240
      %p242 = scmp.ne.s32.totalorder %s228, %s229
      %p243 = scmp.eq.s32.totalorder %s33, 1
      %p244 = por %p242, %p243
      %p246 = scmp.ne.s32.totalorder %s229, %s245
      %p247 = scmp.eq.s32.totalorder %s33, 0
      %p248 = por %p246, %p247
      %s249 = ssub.s32 %s27, %s34
      %p250 = scmp.eq.s32.totalorder %s249, 0
      %s252 = sadd.s32 %s251, 1
      %s253 = scalar_select %p250, %s251, %s252
      %p256 = pneg %p250
      %p257 = scmp.eq.s32.totalorder %s27, 1
      %p258 = por %p256, %p257
      %p259 = scmp.ne.s32.totalorder %s251, %s254
      %p260 = scmp.eq.s32.totalorder %s27, 0
      %p261 = por %p259, %p260
      %p262 = scmp.ne.s32.totalorder %s251, %s254
      %p263 = scmp.eq.s32.totalorder %s32, 1
      %p264 = por %p262, %p263
      %p265 = scmp.ne.s32.totalorder %s254, %s255
      %p266 = scmp.eq.s32.totalorder %s32, 0
      %p267 = por %p265, %p266
      %p268 = scmp.ne.s32.totalorder %s254, %s255
      %p269 = scmp.eq.s32.totalorder %s33, 1
      %p270 = por %p268, %p269
      %p272 = scmp.ne.s32.totalorder %s255, %s271
      %p273 = scmp.eq.s32.totalorder %s33, 0
      %p274 = por %p272, %p273
      %s275 = ssub.s32 %s27, %s34
      %p276 = scmp.eq.s32.totalorder %s275, 0
      %s278 = sadd.s32 %s277, 1
      %s279 = scalar_select %p276, %s277, %s278
      %p282 = pneg %p276
      %p283 = scmp.eq.s32.totalorder %s27, 1
      %p284 = por %p282, %p283
      %p285 = scmp.ne.s32.totalorder %s277, %s280
      %p286 = scmp.eq.s32.totalorder %s27, 0
      %p287 = por %p285, %p286
      %p288 = scmp.ne.s32.totalorder %s277, %s280
      %p289 = scmp.eq.s32.totalorder %s32, 1
      %p290 = por %p288, %p289
      %p291 = scmp.ne.s32.totalorder %s280, %s281
      %p292 = scmp.eq.s32.totalorder %s32, 0
      %p293 = por %p291, %p292
      %p294 = scmp.ne.s32.totalorder %s280, %s281
      %p295 = scmp.eq.s32.totalorder %s33, 1
      %p296 = por %p294, %p295
      %p298 = scmp.ne.s32.totalorder %s281, %s297
      %p299 = scmp.eq.s32.totalorder %s33, 0
      %p300 = por %p298, %p299
      %s301 = ssub.s32 %s27, %s34
      %p302 = scmp.eq.s32.totalorder %s301, 0
      %s304 = sadd.s32 %s303, 1
      %s305 = scalar_select %p302, %s303, %s304
      %p308 = pneg %p302
      %p309 = scmp.eq.s32.totalorder %s27, 1
      %p310 = por %p308, %p309
      %p311 = scmp.ne.s32.totalorder %s303, %s306
      %p312 = scmp.eq.s32.totalorder %s27, 0
      %p313 = por %p311, %p312
      %p314 = scmp.ne.s32.totalorder %s303, %s306
      %p315 = scmp.eq.s32.totalorder %s32, 1
      %p316 = por %p314, %p315
      %p317 = scmp.ne.s32.totalorder %s306, %s307
      %p318 = scmp.eq.s32.totalorder %s32, 0
      %p319 = por %p317, %p318
      %p320 = scmp.ne.s32.totalorder %s306, %s307
      %p321 = scmp.eq.s32.totalorder %s33, 1
      %p322 = por %p320, %p321
      %p324 = scmp.ne.s32.totalorder %s307, %s323
      %p325 = scmp.eq.s32.totalorder %s33, 0
      %p326 = por %p324, %p325
      %s327 = ssub.s32 %s27, %s34
      %p328 = scmp.eq.s32.totalorder %s327, 0
      %s330 = sadd.s32 %s329, 1
      %s331 = scalar_select %p328, %s329, %s330
      %p334 = pneg %p328
      %p335 = scmp.eq.s32.totalorder %s27, 1
      %p336 = por %p334, %p335
      %p337 = scmp.ne.s32.totalorder %s329, %s332
      %p338 = scmp.eq.s32.totalorder %s27, 0
      %p339 = por %p337, %p338
      %p340 = scmp.ne.s32.totalorder %s329, %s332
      %p341 = scmp.eq.s32.totalorder %s32, 1
      %p342 = por %p340, %p341
      %p343 = scmp.ne.s32.totalorder %s332, %s333
      %p344 = scmp.eq.s32.totalorder %s32, 0
      %p345 = por %p343, %p344
      %p346 = scmp.ne.s32.totalorder %s332, %s333
      %p347 = scmp.eq.s32.totalorder %s33, 1
      %p348 = por %p346, %p347
      %p350 = scmp.ne.s32.totalorder %s333, %s349
      %p351 = scmp.eq.s32.totalorder %s33, 0
      %p352 = por %p350, %p351
      %s353 = ssub.s32 %s27, %s34
      %p354 = scmp.eq.s32.totalorder %s353, 0
      %s356 = sadd.s32 %s355, 1
      %s357 = scalar_select %p354, %s355, %s356
      %p360 = pneg %p354
      %p361 = scmp.eq.s32.totalorder %s27, 1
      %p362 = por %p360, %p361
      %p363 = scmp.ne.s32.totalorder %s355, %s358
      %p364 = scmp.eq.s32.totalorder %s27, 0
      %p365 = por %p363, %p364
      %p366 = scmp.ne.s32.totalorder %s355, %s358
      %p367 = scmp.eq.s32.totalorder %s32, 1
      %p368 = por %p366, %p367
      %p369 = scmp.ne.s32.totalorder %s358, %s359
      %p370 = scmp.eq.s32.totalorder %s32, 0
      %p371 = por %p369, %p370
      %p372 = scmp.ne.s32.totalorder %s358, %s359
      %p373 = scmp.eq.s32.totalorder %s33, 1
      %p374 = por %p372, %p373
      %p376 = scmp.ne.s32.totalorder %s359, %s375
      %p377 = scmp.eq.s32.totalorder %s33, 0
      %p378 = por %p376, %p377
      %s379 = ssub.s32 %s27, %s34
      %p380 = scmp.eq.s32.totalorder %s379, 0
      %s382 = sadd.s32 %s381, 1
      %s383 = scalar_select %p380, %s381, %s382
      %p386 = pneg %p380
      %p387 = scmp.eq.s32.totalorder %s27, 1
      %p388 = por %p386, %p387
      %p389 = scmp.ne.s32.totalorder %s381, %s384
      %p390 = scmp.eq.s32.totalorder %s27, 0
      %p391 = por %p389, %p390
      %p392 = scmp.ne.s32.totalorder %s381, %s384
      %p393 = scmp.eq.s32.totalorder %s32, 1
      %p394 = por %p392, %p393
      %p395 = scmp.ne.s32.totalorder %s384, %s385
      %p396 = scmp.eq.s32.totalorder %s32, 0
      %p397 = por %p395, %p396
      %p398 = scmp.ne.s32.totalorder %s384, %s385
      %p399 = scmp.eq.s32.totalorder %s33, 1
      %p400 = por %p398, %p399
      %p402 = scmp.ne.s32.totalorder %s385, %s401
      %p403 = scmp.eq.s32.totalorder %s33, 0
      %p404 = por %p402, %p403
      %s405 = ssub.s32 %s27, %s34
      %p406 = scmp.eq.s32.totalorder %s405, 0
      %s408 = sadd.s32 %s407, 1
      %s409 = scalar_select %p406, %s407, %s408
      %p412 = pneg %p406
      %p413 = scmp.eq.s32.totalorder %s27, 1
      %p414 = por %p412, %p413
      %p415 = scmp.ne.s32.totalorder %s407, %s410
      %p416 = scmp.eq.s32.totalorder %s27, 0
      %p417 = por %p415, %p416
      %p418 = scmp.ne.s32.totalorder %s407, %s410
      %p419 = scmp.eq.s32.totalorder %s32, 1
      %p420 = por %p418, %p419
      %p421 = scmp.ne.s32.totalorder %s410, %s411
      %p422 = scmp.eq.s32.totalorder %s32, 0
      %p423 = por %p421, %p422
      %p424 = scmp.ne.s32.totalorder %s410, %s411
      %p425 = scmp.eq.s32.totalorder %s33, 1
      %p426 = por %p424, %p425
      %p428 = scmp.ne.s32.totalorder %s411, %s427
      %p429 = scmp.eq.s32.totalorder %s33, 0
      %p430 = por %p428, %p429
      %s432 = sadd.s32 %s431, 1
      %p435 = scmp.eq.s32.totalorder %s27, 1
      %p436 = scmp.ne.s32.totalorder %s431, %s433
      %p437 = scmp.eq.s32.totalorder %s27, 0
      %p438 = por %p436, %p437
      %p439 = scmp.ne.s32.totalorder %s431, %s433
      %p440 = scmp.eq.s32.totalorder %s32, 1
      %p441 = por %p439, %p440
      %p442 = scmp.ne.s32.totalorder %s433, %s434
      %p443 = scmp.eq.s32.totalorder %s32, 0
      %p444 = por %p442, %p443
      %p445 = scmp.ne.s32.totalorder %s433, %s434
      %p446 = scmp.eq.s32.totalorder %s33, 1
      %p447 = por %p445, %p446
      %p449 = scmp.ne.s32.totalorder %s434, %s448
      %p450 = scmp.eq.s32.totalorder %s33, 0
      %p451 = por %p449, %p450
      %s453 = sadd.s32 %s452, 1
      %p456 = scmp.eq.s32.totalorder %s27, 1
      %p457 = scmp.ne.s32.totalorder %s452, %s454
      %p458 = scmp.eq.s32.totalorder %s27, 0
      %p459 = por %p457, %p458
      %p460 = scmp.ne.s32.totalorder %s452, %s454
      %p461 = scmp.eq.s32.totalorder %s32, 1
      %p462 = por %p460, %p461
      %p463 = scmp.ne.s32.totalorder %s454, %s455
      %p464 = scmp.eq.s32.totalorder %s32, 0
      %p465 = por %p463, %p464
      %p466 = scmp.ne.s32.totalorder %s454, %s455
      %p467 = scmp.eq.s32.totalorder %s33, 1
      %p468 = por %p466, %p467
      %p470 = scmp.ne.s32.totalorder %s455, %s469
      %p471 = scmp.eq.s32.totalorder %s33, 0
      %p472 = por %p470, %p471
      %s474 = sadd.s32 %s473, 1
      %p477 = scmp.eq.s32.totalorder %s27, 1
      %p478 = scmp.ne.s32.totalorder %s473, %s475
      %p479 = scmp.eq.s32.totalorder %s27, 0
      %p480 = por %p478, %p479
      %p481 = scmp.ne.s32.totalorder %s473, %s475
      %p482 = scmp.eq.s32.totalorder %s32, 1
      %p483 = por %p481, %p482
      %p484 = scmp.ne.s32.totalorder %s475, %s476
      %p485 = scmp.eq.s32.totalorder %s32, 0
      %p486 = por %p484, %p485
      %p487 = scmp.ne.s32.totalorder %s475, %s476
      %p488 = scmp.eq.s32.totalorder %s33, 1
      %p489 = por %p487, %p488
      %p491 = scmp.ne.s32.totalorder %s476, %s490
      %p492 = scmp.eq.s32.totalorder %s33, 0
      %p493 = por %p491, %p492
      %s495 = sadd.s32 %s494, 1
      %p498 = scmp.eq.s32.totalorder %s27, 1
      %p499 = scmp.ne.s32.totalorder %s494, %s496
      %p500 = scmp.eq.s32.totalorder %s27, 0
      %p501 = por %p499, %p500
      %p502 = scmp.ne.s32.totalorder %s494, %s496
      %p503 = scmp.eq.s32.totalorder %s32, 1
      %p504 = por %p502, %p503
      %p505 = scmp.ne.s32.totalorder %s496, %s497
      %p506 = scmp.eq.s32.totalorder %s32, 0
      %p507 = por %p505, %p506
      %p508 = scmp.ne.s32.totalorder %s496, %s497
      %p509 = scmp.eq.s32.totalorder %s33, 1
      %p510 = por %p508, %p509
      %p512 = scmp.ne.s32.totalorder %s497, %s511
      %p513 = scmp.eq.s32.totalorder %s33, 0
      %p514 = por %p512, %p513
      %s516 = sadd.s32 %s515, 1
      %p519 = scmp.eq.s32.totalorder %s27, 1
      %p520 = scmp.ne.s32.totalorder %s515, %s517
      %p521 = scmp.eq.s32.totalorder %s27, 0
      %p522 = por %p520, %p521
      %p523 = scmp.ne.s32.totalorder %s515, %s517
      %p524 = scmp.eq.s32.totalorder %s32, 1
      %p525 = por %p523, %p524
      %p526 = scmp.ne.s32.totalorder %s517, %s518
      %p527 = scmp.eq.s32.totalorder %s32, 0
      %p528 = por %p526, %p527
      %p529 = scmp.ne.s32.totalorder %s517, %s518
      %p530 = scmp.eq.s32.totalorder %s33, 1
      %p531 = por %p529, %p530
      %p533 = scmp.ne.s32.totalorder %s518, %s532
      %p534 = scmp.eq.s32.totalorder %s33, 0
      %p535 = por %p533, %p534
      %p536 = scmp.le.s32.totalorder 1, %s27
      %p537 = scmp.lt.s32.totalorder %s27, 3
      %p538 = pnand %p536, %p537
      %p539 = pneg %p538
      // Predicated region
      $region9: #{bert_class_forward.1} parent=5 // pred_check
        _
      $region10: #{bert_class_forward.1} parent=5 // pred_check_branch
        %541 = sbr.rel (%p538) target = $region12
      $region11: #{bert_class_forward.1} parent=5 // pred_region
        %s542 = ssub.s32 %s27, 1
        // Predicated region
        $region13: #{bert_class_forward.1} parent=11 // pred_check
          %p543 = pneg %p48
        $region14: #{bert_class_forward.1} parent=11 // pred_check_branch
          %545 = sbr.rel (%p543) target = $region16
        $region15: #{bert_class_forward.1} parent=11 // pred_region
          _
        $region16: #{bert_class_forward.1} parent=11 // pred_fallthru
          _
        // Predicated region
        $region17: #{bert_class_forward.1} parent=11 // pred_check
          %p546 = pneg %p69
        $region18: #{bert_class_forward.1} parent=11 // pred_check_branch
          %548 = sbr.rel (%p546) target = $region20
        $region19: #{bert_class_forward.1} parent=11 // pred_region
          _
        $region20: #{bert_class_forward.1} parent=11 // pred_fallthru
          _
        // Predicated region
        $region21: #{bert_class_forward.1} parent=11 // pred_check
          %p549 = pneg %p90
        $region22: #{bert_class_forward.1} parent=11 // pred_check_branch
          %551 = sbr.rel (%p549) target = $region24
        $region23: #{bert_class_forward.1} parent=11 // pred_region
          _
        $region24: #{bert_class_forward.1} parent=11 // pred_fallthru
          _
        // Predicated region
        $region25: #{bert_class_forward.1} parent=11 // pred_check
          %p552 = pneg %p111
        $region26: #{bert_class_forward.1} parent=11 // pred_check_branch
          %554 = sbr.rel (%p552) target = $region28
        $region27: #{bert_class_forward.1} parent=11 // pred_region
          _
        $region28: #{bert_class_forward.1} parent=11 // pred_fallthru
          _
        // Predicated region
        $region29: #{bert_class_forward.1} parent=11 // pred_check
          %p555 = pneg %p444
        $region30: #{bert_class_forward.1} parent=11 // pred_check_branch
          %557 = sbr.rel (%p555) target = $region32
        $region31: #{bert_class_forward.1} parent=11 // pred_region
          _
        $region32: #{bert_class_forward.1} parent=11 // pred_fallthru
          _
        // Predicated region
        $region33: #{bert_class_forward.1} parent=11 // pred_check
          %p558 = pneg %p465
        $region34: #{bert_class_forward.1} parent=11 // pred_check_branch
          %560 = sbr.rel (%p558) target = $region36
        $region35: #{bert_class_forward.1} parent=11 // pred_region
          _
        $region36: #{bert_class_forward.1} parent=11 // pred_fallthru
          _
        // Predicated region
        $region37: #{bert_class_forward.1} parent=11 // pred_check
          %p561 = pneg %p486
        $region38: #{bert_class_forward.1} parent=11 // pred_check_branch
          %563 = sbr.rel (%p561) target = $region40
        $region39: #{bert_class_forward.1} parent=11 // pred_region
          _
        $region40: #{bert_class_forward.1} parent=11 // pred_fallthru
          _
        // Predicated region
        $region41: #{bert_class_forward.1} parent=11 // pred_check
          %p564 = pneg %p507
        $region42: #{bert_class_forward.1} parent=11 // pred_check_branch
          %566 = sbr.rel (%p564) target = $region44
        $region43: #{bert_class_forward.1} parent=11 // pred_region
          _
        $region44: #{bert_class_forward.1} parent=11 // pred_fallthru
          _
      $region12: #{bert_class_forward.1} parent=5 // pred_fallthru
        _
      %p567 = scmp.lt.s32.totalorder %s27, 2
      // Predicated region
      $region45: #{bert_class_forward.1} parent=5 // pred_check
        %p568 = pneg %p567
      $region46: #{bert_class_forward.1} parent=5 // pred_check_branch
        %570 = sbr.rel (%p568) target = $region48
      $region47: #{bert_class_forward.1} parent=5 // pred_region
        // Predicated region
        $region49: #{bert_class_forward.1} parent=47 // pred_check
          %p571 = pneg %p131
        $region50: #{bert_class_forward.1} parent=47 // pred_check_branch
          %573 = sbr.rel (%p571) target = $region52
        $region51: #{bert_class_forward.1} parent=47 // pred_region
          %p574 = scmp.lt.s32.totalorder %s27, 1
          %s575 = scalar_select %p574, %s27, 1
          %s576 = smul.addr %s575, 48
          %s577 = smul.addr %s576, 4
          %s578 = scalar_lea.vmem %s4, %s577
        $region52: #{bert_class_forward.1} parent=47 // pred_fallthru
          _
        // Predicated region
        $region53: #{bert_class_forward.1} parent=47 // pred_check
          %p579 = pneg %p157
        $region54: #{bert_class_forward.1} parent=47 // pred_check_branch
          %581 = sbr.rel (%p579) target = $region56
        $region55: #{bert_class_forward.1} parent=47 // pred_region
          %p582 = scmp.lt.s32.totalorder %s27, 1
          %s583 = scalar_select %p582, %s27, 1
          %s584 = smul.addr %s583, 3
          %s585 = scalar_lea.vmem %s5, %s584
        $region56: #{bert_class_forward.1} parent=47 // pred_fallthru
          _
        // Predicated region
        $region57: #{bert_class_forward.1} parent=47 // pred_check
          %p586 = pneg %p183
        $region58: #{bert_class_forward.1} parent=47 // pred_check_branch
          %588 = sbr.rel (%p586) target = $region60
        $region59: #{bert_class_forward.1} parent=47 // pred_region
          %p589 = scmp.lt.s32.totalorder %s27, 1
          %s590 = scalar_select %p589, %s27, 1
          %s591 = smul.addr %s590, 16
          %s592 = smul.addr %s591, 4
          %s593 = scalar_lea.vmem %s6, %s592
        $region60: #{bert_class_forward.1} parent=47 // pred_fallthru
          _
        // Predicated region
        $region61: #{bert_class_forward.1} parent=47 // pred_check
          %p594 = pneg %p209
        $region62: #{bert_class_forward.1} parent=47 // pred_check_branch
          %596 = sbr.rel (%p594) target = $region64
        $region63: #{bert_class_forward.1} parent=47 // pred_region
          %p597 = scmp.lt.s32.totalorder %s27, 1
          %s598 = scalar_select %p597, %s27, 1
          %s599 = scalar_lea.vmem %s7, %s598
        $region64: #{bert_class_forward.1} parent=47 // pred_fallthru
          _
        // Predicated region
        $region65: #{bert_class_forward.1} parent=47 // pred_check
          %p600 = pneg %p235
        $region66: #{bert_class_forward.1} parent=47 // pred_check_branch
          %602 = sbr.rel (%p600) target = $region68
        $region67: #{bert_class_forward.1} parent=47 // pred_region
          %p603 = scmp.lt.s32.totalorder %s27, 1
          %s604 = scalar_select %p603, %s27, 1
          %s605 = scalar_lea.vmem %s8, %s604
        $region68: #{bert_class_forward.1} parent=47 // pred_fallthru
          _
        // Predicated region
        $region69: #{bert_class_forward.1} parent=47 // pred_check
          %p606 = pneg %p261
        $region70: #{bert_class_forward.1} parent=47 // pred_check_branch
          %608 = sbr.rel (%p606) target = $region72
        $region71: #{bert_class_forward.1} parent=47 // pred_region
          %p609 = scmp.lt.s32.totalorder %s27, 1
          %s610 = scalar_select %p609, %s27, 1
          %s611 = scalar_lea.vmem %s9, %s610
        $region72: #{bert_class_forward.1} parent=47 // pred_fallthru
          _
        // Predicated region
        $region73: #{bert_class_forward.1} parent=47 // pred_check
          %p612 = pneg %p287
        $region74: #{bert_class_forward.1} parent=47 // pred_check_branch
          %614 = sbr.rel (%p612) target = $region76
        $region75: #{bert_class_forward.1} parent=47 // pred_region
          %p615 = scmp.lt.s32.totalorder %s27, 1
          %s616 = scalar_select %p615, %s27, 1
          %s617 = smul.addr %s616, 32
          %s618 = smul.addr %s617, 4
          %s619 = scalar_lea.vmem %s10, %s618
        $region76: #{bert_class_forward.1} parent=47 // pred_fallthru
          _
        // Predicated region
        $region77: #{bert_class_forward.1} parent=47 // pred_check
          %p620 = pneg %p313
        $region78: #{bert_class_forward.1} parent=47 // pred_check_branch
          %622 = sbr.rel (%p620) target = $region80
        $region79: #{bert_class_forward.1} parent=47 // pred_region
          %p623 = scmp.lt.s32.totalorder %s27, 1
          %s624 = scalar_select %p623, %s27, 1
          %s625 = smul.addr %s624, 2
          %s626 = scalar_lea.vmem %s11, %s625
        $region80: #{bert_class_forward.1} parent=47 // pred_fallthru
          _
        // Predicated region
        $region81: #{bert_class_forward.1} parent=47 // pred_check
          %p627 = pneg %p339
        $region82: #{bert_class_forward.1} parent=47 // pred_check_branch
          %629 = sbr.rel (%p627) target = $region84
        $region83: #{bert_class_forward.1} parent=47 // pred_region
          %p630 = scmp.lt.s32.totalorder %s27, 1
          %s631 = scalar_select %p630, %s27, 1
          %s632 = smul.addr %s631, 32
          %s633 = smul.addr %s632, 4
          %s634 = scalar_lea.vmem %s12, %s633
        $region84: #{bert_class_forward.1} parent=47 // pred_fallthru
          _
        // Predicated region
        $region85: #{bert_class_forward.1} parent=47 // pred_check
          %p635 = pneg %p365
        $region86: #{bert_class_forward.1} parent=47 // pred_check_branch
          %637 = sbr.rel (%p635) target = $region88
        $region87: #{bert_class_forward.1} parent=47 // pred_region
          %p638 = scmp.lt.s32.totalorder %s27, 1
          %s639 = scalar_select %p638, %s27, 1
          %s640 = scalar_lea.vmem %s13, %s639
        $region88: #{bert_class_forward.1} parent=47 // pred_fallthru
          _
        // Predicated region
        $region89: #{bert_class_forward.1} parent=47 // pred_check
          %p641 = pneg %p391
        $region90: #{bert_class_forward.1} parent=47 // pred_check_branch
          %643 = sbr.rel (%p641) target = $region92
        $region91: #{bert_class_forward.1} parent=47 // pred_region
          %p644 = scmp.lt.s32.totalorder %s27, 1
          %s645 = scalar_select %p644, %s27, 1
          %s646 = scalar_lea.vmem %s14, %s645
        $region92: #{bert_class_forward.1} parent=47 // pred_fallthru
          _
        // Predicated region
        $region93: #{bert_class_forward.1} parent=47 // pred_check
          %p647 = pneg %p417
        $region94: #{bert_class_forward.1} parent=47 // pred_check_branch
          %649 = sbr.rel (%p647) target = $region96
        $region95: #{bert_class_forward.1} parent=47 // pred_region
          %p650 = scmp.lt.s32.totalorder %s27, 1
          %s651 = scalar_select %p650, %s27, 1
          %s652 = scalar_lea.vmem %s15, %s651
        $region96: #{bert_class_forward.1} parent=47 // pred_fallthru
          _
      $region48: #{bert_class_forward.1} parent=5 // pred_fallthru
        _
      %p653 = scmp.le.s32.totalorder 1, %s27
      %p654 = scmp.lt.s32.totalorder %s27, 3
      %p655 = pnand %p653, %p654
      %p656 = pneg %p655
      // Predicated region
      $region97: #{bert_class_forward.1} parent=5 // pred_check
        _
      $region98: #{bert_class_forward.1} parent=5 // pred_check_branch
        %658 = sbr.rel (%p655) target = $region100
      $region99: #{bert_class_forward.1} parent=5 // pred_region
        %s659 = ssub.s32 %s27, 1
        %p660 = pneg %p48
        %p661 = pneg %p45
        %p662 = pneg %p69
        %p663 = pneg %p66
        %p664 = pneg %p90
        %p665 = pneg %p87
        %p666 = pneg %p111
        %p667 = pneg %p108
        %p668 = scmp.lt.s32.totalorder %s32, 1
        %s669 = scalar_select %p668, %s32, 1
        %s670 = smul.addr %s669, 48
        %s671 = smul.addr %s670, 4
        %s672 = scalar_lea.vmem %s4, %s671
        %p673 = pneg %p137
        %p674 = pneg %p134
        %p675 = scmp.lt.s32.totalorder %s32, 1
        %s676 = scalar_select %p675, %s32, 1
        %s677 = smul.addr %s676, 3
        %s678 = scalar_lea.vmem %s5, %s677
        %p679 = pneg %p163
        %p680 = pneg %p160
        %p681 = scmp.lt.s32.totalorder %s32, 1
        %s682 = scalar_select %p681, %s32, 1
        %s683 = smul.addr %s682, 16
        %s684 = smul.addr %s683, 4
        %s685 = scalar_lea.vmem %s6, %s684
        %p686 = pneg %p189
        %p687 = pneg %p186
        %p688 = scmp.lt.s32.totalorder %s32, 1
        %s689 = scalar_select %p688, %s32, 1
        %s690 = scalar_lea.vmem %s7, %s689
        %p691 = pneg %p215
        %p692 = pneg %p212
        %p693 = scmp.lt.s32.totalorder %s32, 1
        %s694 = scalar_select %p693, %s32, 1
        %s695 = scalar_lea.vmem %s8, %s694
        %p696 = pneg %p241
        %p697 = pneg %p238
        %p698 = scmp.lt.s32.totalorder %s32, 1
        %s699 = scalar_select %p698, %s32, 1
        %s700 = scalar_lea.vmem %s9, %s699
        %p701 = pneg %p267
        %p702 = pneg %p264
        %p703 = scmp.lt.s32.totalorder %s32, 1
        %s704 = scalar_select %p703, %s32, 1
        %s705 = smul.addr %s704, 32
        %s706 = smul.addr %s705, 4
        %s707 = scalar_lea.vmem %s10, %s706
        %p708 = pneg %p293
        %p709 = pneg %p290
        %p710 = scmp.lt.s32.totalorder %s32, 1
        %s711 = scalar_select %p710, %s32, 1
        %s712 = smul.addr %s711, 2
        %s713 = scalar_lea.vmem %s11, %s712
        %p714 = pneg %p319
        %p715 = pneg %p316
        %p716 = scmp.lt.s32.totalorder %s32, 1
        %s717 = scalar_select %p716, %s32, 1
        %s718 = smul.addr %s717, 32
        %s719 = smul.addr %s718, 4
        %s720 = scalar_lea.vmem %s12, %s719
        %p721 = pneg %p345
        %p722 = pneg %p342
        %p723 = scmp.lt.s32.totalorder %s32, 1
        %s724 = scalar_select %p723, %s32, 1
        %s725 = scalar_lea.vmem %s13, %s724
        %p726 = pneg %p371
        %p727 = pneg %p368
        %p728 = scmp.lt.s32.totalorder %s32, 1
        %s729 = scalar_select %p728, %s32, 1
        %s730 = scalar_lea.vmem %s14, %s729
        %p731 = pneg %p397
        %p732 = pneg %p394
        %p733 = scmp.lt.s32.totalorder %s32, 1
        %s734 = scalar_select %p733, %s32, 1
        %s735 = scalar_lea.vmem %s15, %s734
        %p736 = pneg %p423
        %p737 = pneg %p420
        %p738 = pneg %p444
        %p739 = pneg %p441
        %p740 = pneg %p465
        %p741 = pneg %p462
        %p742 = pneg %p486
        %p743 = pneg %p483
        %p744 = pneg %p507
        %p745 = pneg %p504
        %p746 = pneg %p528
        %p747 = pneg %p525
        %p748 = scmp.lt.s32.totalorder %s32, 1
        %s749 = scalar_select %p748, %s32, 1
        %s750 = smul.addr %s749, 48
        %s751 = smul.addr %s750, 4
        %s752 = scalar_lea.vmem %s4, %s751
        %p753 = scmp.lt.s32.totalorder %s32, 1
        %s754 = scalar_select %p753, %s32, 1
        %s755 = smul.addr %s754, 3
        %s756 = scalar_lea.vmem %s5, %s755
        %p757 = scmp.lt.s32.totalorder %s32, 1
        %s758 = scalar_select %p757, %s32, 1
        %s759 = smul.addr %s758, 16
        %s760 = smul.addr %s759, 4
        %s761 = scalar_lea.vmem %s6, %s760
        %p762 = scmp.lt.s32.totalorder %s32, 1
        %s763 = scalar_select %p762, %s32, 1
        %s764 = scalar_lea.vmem %s7, %s763
        %p765 = scmp.lt.s32.totalorder %s32, 1
        %s766 = scalar_select %p765, %s32, 1
        %s767 = scalar_lea.vmem %s8, %s766
        %p768 = scmp.lt.s32.totalorder %s32, 1
        %s769 = scalar_select %p768, %s32, 1
        %s770 = scalar_lea.vmem %s9, %s769
        %p771 = scmp.lt.s32.totalorder %s32, 1
        %s772 = scalar_select %p771, %s32, 1
        %s773 = smul.addr %s772, 32
        %s774 = smul.addr %s773, 4
        %s775 = scalar_lea.vmem %s10, %s774
        %p776 = scmp.lt.s32.totalorder %s32, 1
        %s777 = scalar_select %p776, %s32, 1
        %s778 = smul.addr %s777, 2
        %s779 = scalar_lea.vmem %s11, %s778
        %p780 = scmp.lt.s32.totalorder %s32, 1
        %s781 = scalar_select %p780, %s32, 1
        %s782 = smul.addr %s781, 32
        %s783 = smul.addr %s782, 4
        %s784 = scalar_lea.vmem %s12, %s783
        %p785 = scmp.lt.s32.totalorder %s32, 1
        %s786 = scalar_select %p785, %s32, 1
        %s787 = scalar_lea.vmem %s13, %s786
        %p788 = scmp.lt.s32.totalorder %s32, 1
        %s789 = scalar_select %p788, %s32, 1
        %s790 = scalar_lea.vmem %s14, %s789
        %p791 = scmp.lt.s32.totalorder %s32, 1
        %s792 = scalar_select %p791, %s32, 1
        %s793 = scalar_lea.vmem %s15, %s792
        %p795 = scmp.eq.s32.totalorder %s32, 0
        // Predicated region
        $region101: #{bert_class_forward.1} parent=99 // pred_check
          %p796 = pneg %p795
        $region102: #{bert_class_forward.1} parent=99 // pred_check_branch
          %798 = sbr.rel (%p796) target = $region104
        $region103: #{bert_class_forward.1} parent=99 // pred_region
          %v799 = vld [vmem:[%s0] sm:$0xff]
          %v800 = vld [vmem:[%s0 + $0x8] sm:$0xff]
          %v801 = vld [vmem:[%s1] sm:$0x1]
          %v802 = vld [vmem:[%s2] sm:$0x1]
          %803 = vadd.xlane.f32.xlu0 %v799
          %v804 = vpop.xlane.xlu0 %803
          %805 = vadd.xlane.f32.xlu0 %v800
          %v806 = vpop.xlane.xlu0 %805
          %v807 = vrcp.pop 128.0
          %v808 = vmul.f32 %v804, %v807
          %v809 = vmul.f32 %v806, %v807
          %v810 = vsub.f32 %v799, %v808
          %v811 = vsub.f32 %v800, %v809
          %v812 = vmul.f32 %v810, %v810
          %v813 = vmul.f32 %v811, %v811
          %814 = vadd.xlane.f32.xlu0 %v812
          %v815 = vpop.xlane.xlu0 %814
          %816 = vadd.xlane.f32.xlu0 %v813
          %v817 = vpop.xlane.xlu0 %816
          %v818 = vmul.f32 %v815, %v807
          %v819 = vmul.f32 %v817, %v807
          %v820 = vadd.f32 %v818, 1e-12
          %v821 = vadd.f32 %v819, 1e-12
          %v822 = vrsqrt.pop %v820
          %v823 = vrsqrt.pop %v821
          %v824 = vmul.f32 %v810, %v822
          %v825 = vmul.f32 %v811, %v823
          %v827 = vlaneseq
          %v828 = vshrl.u32 %v827, 7
          %v829 = vsub.s32 0, %v828
          %v830 = vrot.slane %v801, %v829
          %v832 = vmul.f32 %v824, %v830
          %v833 = vmul.f32 %v825, %v830
          %v835 = vlaneseq
          %v836 = vshrl.u32 %v835, 7
          %v837 = vsub.s32 0, %v836
          %v838 = vrot.slane %v802, %v837
          %v840 = vadd.f32 %v832, %v838
          %v841 = vadd.f32 %v833, %v838
          %842 = vst [vmem:[#allocation2] sm:$0xff] %v840
          %843 = vst [vmem:[#allocation2 + $0x8] sm:$0xff] %v841
          %844 = vst [vmem:[#allocation3] sm:$0x3] 0.0
        $region104: #{bert_class_forward.1} parent=99 // pred_fallthru
          _
        %v845 = vld [vmem:[#allocation2] sm:$0xff]
        %v846 = vld [vmem:[#allocation2 + $0x8] sm:$0xff]
        %v847 = vld [vmem:[%s756] sm:$0x7]
        %v848 = vpack.c.bf16 %v846, %v845
        %v849 = vld [vmem:[%s752] sm:$0xff]
        %v850 = vld [vmem:[%s752 + $0x8] sm:$0xf]
        %v851 = vld [vmem:[%s752 + $0xc] sm:$0xff]
        %v852 = vld [vmem:[%s752 + $0x14] sm:$0xf]
        %v853 = vld [vmem:[%s752 + $0x18] sm:$0xff]
        %v854 = vld [vmem:[%s752 + $0x20] sm:$0xf]
        %v855 = vld [vmem:[%s752 + $0x24] sm:$0xff]
        %v856 = vld [vmem:[%s752 + $0x2c] sm:$0xf]
        %v857 = vld [vmem:[%s752 + $0x30] sm:$0xff]
        %v858 = vld [vmem:[%s752 + $0x38] sm:$0xf]
        %v859 = vld [vmem:[%s752 + $0x3c] sm:$0xff]
        %v860 = vld [vmem:[%s752 + $0x44] sm:$0xf]
        %v861 = vld [vmem:[%s752 + $0x48] sm:$0xff]
        %v862 = vld [vmem:[%s752 + $0x50] sm:$0xf]
        %v863 = vld [vmem:[%s752 + $0x54] sm:$0xff]
        %v864 = vld [vmem:[%s752 + $0x5c] sm:$0xf]
        %v865 = vld [vmem:[%s752 + $0x60] sm:$0xff]
        %v866 = vld [vmem:[%s752 + $0x68] sm:$0xf]
        %v867 = vld [vmem:[%s752 + $0x6c] sm:$0xff]
        %v868 = vld [vmem:[%s752 + $0x74] sm:$0xf]
        %v869 = vld [vmem:[%s752 + $0x78] sm:$0xff]
        %v870 = vld [vmem:[%s752 + $0x80] sm:$0xf]
        %v871 = vld [vmem:[%s752 + $0x84] sm:$0xff]
        %v872 = vld [vmem:[%s752 + $0x8c] sm:$0xf]
        %v873 = vld [vmem:[%s752 + $0x90] sm:$0xff]
        %v874 = vld [vmem:[%s752 + $0x98] sm:$0xf]
        %v875 = vld [vmem:[%s752 + $0x9c] sm:$0xff]
        %v876 = vld [vmem:[%s752 + $0xa4] sm:$0xf]
        %v877 = vld [vmem:[%s752 + $0xa8] sm:$0xff]
        %v878 = vld [vmem:[%s752 + $0xb0] sm:$0xf]
        %v879 = vld [vmem:[%s752 + $0xb4] sm:$0xff]
        %v880 = vld [vmem:[%s752 + $0xbc] sm:$0xf]
        %v882 = vlaneseq
        %v883 = vshrl.u32 %v882, 7
        %v884 = vsub.s32 0, %v883
        %v885 = vrot.slane %v847, %v884
        %v886 = vlaneseq
        %v887 = vshrl.u32 %v886, 7
        %v888 = vsub.s32 1, %v887
        %v889 = vrot.slane %v847, %v888
        %v890 = vlaneseq
        %v891 = vshrl.u32 %v890, 7
        %v892 = vsub.s32 2, %v891
        %v893 = vrot.slane %v847, %v892
        %v929 = vunpack.c.l.b16 %v849
        %v930 = vunpack.c.h.b16 %v849
        %v931 = vunpack.c.l.b16 %v850
        %v932 = vunpack.c.l.b16 %v851
        %v933 = vunpack.c.h.b16 %v851
        %v934 = vunpack.c.l.b16 %v852
        %v935 = vunpack.c.l.b16 %v853
        %v936 = vunpack.c.h.b16 %v853
        %v937 = vunpack.c.l.b16 %v854
        %v938 = vunpack.c.l.b16 %v855
        %v939 = vunpack.c.h.b16 %v855
        %v940 = vunpack.c.l.b16 %v856
        %v941 = vunpack.c.l.b16 %v857
        %v942 = vunpack.c.h.b16 %v857
        %v943 = vunpack.c.l.b16 %v858
        %v944 = vunpack.c.l.b16 %v859
        %v945 = vunpack.c.h.b16 %v859
        %v946 = vunpack.c.l.b16 %v860
        %v947 = vunpack.c.l.b16 %v861
        %v948 = vunpack.c.h.b16 %v861
        %v949 = vunpack.c.l.b16 %v862
        %v950 = vunpack.c.l.b16 %v863
        %v951 = vunpack.c.h.b16 %v863
        %v952 = vunpack.c.l.b16 %v864
        %v953 = vunpack.c.l.b16 %v865
        %v954 = vunpack.c.h.b16 %v865
        %v955 = vunpack.c.l.b16 %v866
        %v956 = vunpack.c.l.b16 %v867
        %v957 = vunpack.c.h.b16 %v867
        %v958 = vunpack.c.l.b16 %v868
        %v959 = vunpack.c.l.b16 %v869
        %v960 = vunpack.c.h.b16 %v869
        %v961 = vunpack.c.l.b16 %v870
        %v962 = vunpack.c.l.b16 %v871
        %v963 = vunpack.c.h.b16 %v871
        %v964 = vunpack.c.l.b16 %v872
        %v965 = vunpack.c.l.b16 %v873
        %v966 = vunpack.c.h.b16 %v873
        %v967 = vunpack.c.l.b16 %v874
        %v968 = vunpack.c.l.b16 %v875
        %v969 = vunpack.c.h.b16 %v875
        %v970 = vunpack.c.l.b16 %v876
        %v971 = vunpack.c.l.b16 %v877
        %v972 = vunpack.c.h.b16 %v877
        %v973 = vunpack.c.l.b16 %v878
        %v974 = vunpack.c.l.b16 %v879
        %v975 = vunpack.c.h.b16 %v879
        %v976 = vunpack.c.l.b16 %v880
        %v977 = vpack.c.b16 %v932, %v929
        %v978 = vpack.c.b16 %v933, %v930
        %v979 = vpack.c.b16 %v934, %v931
        %v980 = vpack.c.b16 %v938, %v935
        %v981 = vpack.c.b16 %v939, %v936
        %v982 = vpack.c.b16 %v940, %v937
        %v983 = vpack.c.b16 %v944, %v941
        %v984 = vpack.c.b16 %v945, %v942
        %v985 = vpack.c.b16 %v946, %v943
        %v986 = vpack.c.b16 %v950, %v947
        %v987 = vpack.c.b16 %v951, %v948
        %v988 = vpack.c.b16 %v952, %v949
        %v989 = vpack.c.b16 %v956, %v953
        %v990 = vpack.c.b16 %v957, %v954
        %v991 = vpack.c.b16 %v958, %v955
        %v992 = vpack.c.b16 %v962, %v959
        %v993 = vpack.c.b16 %v963, %v960
        %v994 = vpack.c.b16 %v964, %v961
        %v995 = vpack.c.b16 %v968, %v965
        %v996 = vpack.c.b16 %v969, %v966
        %v997 = vpack.c.b16 %v970, %v967
        %v998 = vpack.c.b16 %v974, %v971
        %v999 = vpack.c.b16 %v975, %v972
        %v1000 = vpack.c.b16 %v976, %v973
        %1025 = vmatprep.subr.bf16.mxu0 %v978
        %1026 = vmatpush1.bf16.msra.mxu0 %v977
        %1027 = vmatprep.subr.bf16.mxu0 %v981
        %1028 = vmatpush1.bf16.msra.mxu0 %v980
        %1029 = vmatprep.subr.bf16.mxu0 %v984
        %1030 = vmatpush1.bf16.msra.mxu0 %v983
        %1031 = vmatprep.subr.bf16.mxu0 %v987
        %1032 = vmatpush1.bf16.msra.mxu0 %v986
        %1033 = vmatprep.subr.bf16.mxu0 %v990
        %1034 = vmatpush1.bf16.msra.mxu0 %v989
        %1035 = vmatprep.subr.bf16.mxu0 %v993
        %1036 = vmatpush1.bf16.msra.mxu0 %v992
        %1037 = vmatprep.subr.bf16.mxu0 %v996
        %1038 = vmatpush1.bf16.msra.mxu0 %v995
        %1039 = vmatprep.subr.bf16.mxu0 %v999
        %1040 = vmatpush1.bf16.msra.mxu0 %v998
        %1041 = vmatprep.subr.bf16.mxu0 0
        %1042 = vmatpush1.bf16.msra.mxu0 0
        %1043 = vmatprep.subr.bf16.mxu0 0
        %1044 = vmatpush1.bf16.msra.mxu0 0
        %1045 = vmatprep.subr.bf16.mxu0 0
        %1046 = vmatpush1.bf16.msra.mxu0 0
        %1047 = vmatprep.subr.bf16.mxu0 0
        %1048 = vmatpush1.bf16.msra.mxu0 0
        %1049 = vmatprep.subr.bf16.mxu0 0
        %1050 = vmatpush1.bf16.msra.mxu0 0
        %1051 = vmatprep.subr.bf16.mxu0 0
        %1052 = vmatpush1.bf16.msra.mxu0 0
        %1053 = vmatprep.subr.bf16.mxu0 0
        %1054 = vmatpush1.bf16.msra.mxu0 0
        %1055 = vmatprep.subr.bf16.mxu0 0
        %1056 = vmatpush1.bf16.msra.mxu0 0
        %1057 = vmatprep.mubr.bf16.mxu0 0
        %1058 = vmatmul.mubr.bf16.gmra.mrb[0].mxu0 %v848
        %v1059 = vpop.f32.mrb[0].mxu0
        %v1060 = vadd.f32 %v885, %v1059
        %v1061 = vpop.f32.mrb[0].mxu0
        %v1062 = vadd.f32 %v889, %v1061
        %v1063 = vpop.f32.mrb[0].mxu0
        %v1064 = vadd.f32 %v885, %v1063
        %v1065 = vpop.f32.mrb[0].mxu0
        %v1066 = vadd.f32 %v889, %v1065
        %1067 = vdwg.mxu0
        %1068 = vmatprep.subr.bf16.mxu0 0
        %1069 = vmatpush1.bf16.msra.mxu0 %v979
        %1070 = vmatprep.subr.bf16.mxu0 0
        %1071 = vmatpush1.bf16.msra.mxu0 %v982
        %1072 = vmatprep.subr.bf16.mxu0 0
        %1073 = vmatpush1.bf16.msra.mxu0 %v985
        %1074 = vmatprep.subr.bf16.mxu0 0
        %1075 = vmatpush1.bf16.msra.mxu0 %v988
        %1076 = vmatprep.subr.bf16.mxu0 0
        %1077 = vmatpush1.bf16.msra.mxu0 %v991
        %1078 = vmatprep.subr.bf16.mxu0 0
        %1079 = vmatpush1.bf16.msra.mxu0 %v994
        %1080 = vmatprep.subr.bf16.mxu0 0
        %1081 = vmatpush1.bf16.msra.mxu0 %v997
        %1082 = vmatprep.subr.bf16.mxu0 0
        %1083 = vmatpush1.bf16.msra.mxu0 %v1000
        %1084 = vmatprep.subr.bf16.mxu0 0
        %1085 = vmatpush1.bf16.msra.mxu0 0
        %1086 = vmatprep.subr.bf16.mxu0 0
        %1087 = vmatpush1.bf16.msra.mxu0 0
        %1088 = vmatprep.subr.bf16.mxu0 0
        %1089 = vmatpush1.bf16.msra.mxu0 0
        %1090 = vmatprep.subr.bf16.mxu0 0
        %1091 = vmatpush1.bf16.msra.mxu0 0
        %1092 = vmatprep.subr.bf16.mxu0 0
        %1093 = vmatpush1.bf16.msra.mxu0 0
        %1094 = vmatprep.subr.bf16.mxu0 0
        %1095 = vmatpush1.bf16.msra.mxu0 0
        %1096 = vmatprep.subr.bf16.mxu0 0
        %1097 = vmatpush1.bf16.msra.mxu0 0
        %1098 = vmatprep.subr.bf16.mxu0 0
        %1099 = vmatpush1.bf16.msra.mxu0 0
        %1100 = vmatprep.mubr.bf16.mxu0 0
        %1101 = vmatmul.mubr.bf16.gmra.mrb[0].mxu0 %v848
        %v1102 = vpop.f32.mrb[0].mxu0
        %v1103 = vadd.f32 %v893, %v1102
        %v1104 = vpop.f32.mrb[0].mxu0
        %v1105 = vpop.f32.mrb[0].mxu0
        %v1106 = vadd.f32 %v893, %v1105
        %v1107 = vpop.f32.mrb[0].mxu0
        %1108 = vdwg.mxu0
        %1110 = vrot.lane.b32.xlu0 %v1060, 96
        %v1111 = vpop.permute.xlu0 %1110
        %1113 = vrot.lane.b32.xlu0 %v1060, 64
        %v1114 = vpop.permute.xlu0 %1113
        %1116 = vrot.lane.b32.xlu0 %v1060, 32
        %v1117 = vpop.permute.xlu0 %1116
        %1120 = vrot.lane.b32.xlu0 %v1064, 96
        %v1121 = vpop.permute.xlu0 %1120
        %1123 = vrot.lane.b32.xlu0 %v1064, 64
        %v1124 = vpop.permute.xlu0 %1123
        %1126 = vrot.lane.b32.xlu0 %v1064, 32
        %v1127 = vpop.permute.xlu0 %1126
        %v1129 = vpack.c.bf16 %v1111, %v1060
        %v1130 = vpack.c.bf16 %v1117, %v1114
        %v1131 = vpack.c.bf16 %v1121, %v1064
        %v1132 = vpack.c.bf16 %v1127, %v1124
        %1134 = vrot.lane.b32.xlu0 %v1062, 96
        %v1135 = vpop.permute.xlu0 %1134
        %1137 = vrot.lane.b32.xlu0 %v1062, 64
        %v1138 = vpop.permute.xlu0 %1137
        %1140 = vrot.lane.b32.xlu0 %v1062, 32
        %v1141 = vpop.permute.xlu0 %1140
        %1144 = vrot.lane.b32.xlu0 %v1066, 96
        %v1145 = vpop.permute.xlu0 %1144
        %1147 = vrot.lane.b32.xlu0 %v1066, 64
        %v1148 = vpop.permute.xlu0 %1147
        %1150 = vrot.lane.b32.xlu0 %v1066, 32
        %v1151 = vpop.permute.xlu0 %1150
        %v1153 = vpack.c.bf16 %v1135, %v1062
        %v1154 = vpack.c.bf16 %v1141, %v1138
        %v1155 = vpack.c.bf16 %v1145, %v1066
        %v1156 = vpack.c.bf16 %v1151, %v1148
        %1158 = vrot.lane.b32.xlu0 %v1103, 96
        %v1159 = vpop.permute.xlu0 %1158
        %1161 = vrot.lane.b32.xlu0 %v1103, 64
        %v1162 = vpop.permute.xlu0 %1161
        %1164 = vrot.lane.b32.xlu0 %v1103, 32
        %v1165 = vpop.permute.xlu0 %1164
        %1168 = vrot.lane.b32.xlu0 %v1106, 96
        %v1169 = vpop.permute.xlu0 %1168
        %1171 = vrot.lane.b32.xlu0 %v1106, 64
        %v1172 = vpop.permute.xlu0 %1171
        %1174 = vrot.lane.b32.xlu0 %v1106, 32
        %v1175 = vpop.permute.xlu0 %1174
        %v1177 = vpack.c.bf16 %v1159, %v1103
        %v1178 = vpack.c.bf16 %v1165, %v1162
        %v1179 = vpack.c.bf16 %v1169, %v1106
        %v1180 = vpack.c.bf16 %v1175, %v1172
        %vm1181 = vcmask 261120
        %v1183 = vsel %vm1181, %v1129, 0
        %v1186 = vsel %vm1181, %v1130, 0
        %v1189 = vsel %vm1181, %v1131, 0
        %v1192 = vsel %vm1181, %v1132, 0
        %v1195 = vsel %vm1181, %v1153, 0
        %v1198 = vsel %vm1181, %v1154, 0
        %v1201 = vsel %vm1181, %v1155, 0
        %v1204 = vsel %vm1181, %v1156, 0
        %1206 = vmatprep.subr.bf16.mxu0 0
        %1207 = vmatpush1.bf16.xpose.msra.mxu0 %v1195
        %1208 = vmatprep.subr.bf16.mxu0 0
        %1209 = vmatpush1.bf16.xpose.msra.mxu0 %v1198
        %1210 = vmatprep.subr.bf16.mxu0 0
        %1211 = vmatpush1.bf16.xpose.msra.mxu0 %v1201
        %1212 = vmatprep.subr.bf16.mxu0 0
        %1213 = vmatpush1.bf16.xpose.msra.mxu0 %v1204
        %1214 = vmatprep.subr.bf16.mxu0 0
        %1215 = vmatpush1.bf16.xpose.msra.mxu0 0
        %1216 = vmatprep.subr.bf16.mxu0 0
        %1217 = vmatpush1.bf16.xpose.msra.mxu0 0
        %1218 = vmatprep.subr.bf16.mxu0 0
        %1219 = vmatpush1.bf16.xpose.msra.mxu0 0
        %1220 = vmatprep.subr.bf16.mxu0 0
        %1221 = vmatpush1.bf16.xpose.msra.mxu0 0
        %1222 = vmatprep.subr.bf16.mxu0 0
        %1223 = vmatpush1.bf16.xpose.msra.mxu0 0
        %1224 = vmatprep.subr.bf16.mxu0 0
        %1225 = vmatpush1.bf16.xpose.msra.mxu0 0
        %1226 = vmatprep.subr.bf16.mxu0 0
        %1227 = vmatpush1.bf16.xpose.msra.mxu0 0
        %1228 = vmatprep.subr.bf16.mxu0 0
        %1229 = vmatpush1.bf16.xpose.msra.mxu0 0
        %1230 = vmatprep.subr.bf16.mxu0 0
        %1231 = vmatpush1.bf16.xpose.msra.mxu0 0
        %1232 = vmatprep.subr.bf16.mxu0 0
        %1233 = vmatpush1.bf16.xpose.msra.mxu0 0
        %1234 = vmatprep.subr.bf16.mxu0 0
        %1235 = vmatpush1.bf16.xpose.msra.mxu0 0
        %1236 = vmatprep.subr.bf16.mxu0 0
        %1237 = vmatpush1.bf16.xpose.msra.mxu0 0
        %1238 = vmatprep.mubr.bf16.mxu0 0
        %1239 = vmatmul.mubr.bf16.gmra.mrb[0].mxu0 %v1183
        %v1240 = vpop.f32.mrb[0].mxu0
        %v1241 = vadd.f32 0.0, %v1240
        %v1242 = vpop.f32.mrb[0].mxu0
        %v1243 = vpop.f32.mrb[0].mxu0
        %v1244 = vadd.f32 0.0, %v1243
        %v1245 = vpop.f32.mrb[0].mxu0
        %1246 = vmatprep.mubr.bf16.mxu0 0
        %1247 = vmatmul.mubr.bf16.gmra.mrb[0].mxu0 %v1186
        %v1248 = vpop.f32.mrb[0].mxu0
        %v1249 = vadd.f32 0.0, %v1248
        %v1250 = vpop.f32.mrb[0].mxu0
        %v1251 = vpop.f32.mrb[0].mxu0
        %v1252 = vadd.f32 0.0, %v1251
        %v1253 = vpop.f32.mrb[0].mxu0
        %1254 = vmatprep.mubr.bf16.mxu0 0
        %1255 = vmatmul.mubr.bf16.gmra.mrb[0].mxu0 %v1189
        %v1256 = vpop.f32.mrb[0].mxu0
        %v1257 = vadd.f32 0.0, %v1256
        %v1258 = vpop.f32.mrb[0].mxu0
        %v1259 = vpop.f32.mrb[0].mxu0
        %v1260 = vadd.f32 0.0, %v1259
        %v1261 = vpop.f32.mrb[0].mxu0
        %1262 = vmatprep.mubr.bf16.mxu0 0
        %1263 = vmatmul.mubr.bf16.gmra.mrb[0].mxu0 %v1192
        %v1264 = vpop.f32.mrb[0].mxu0
        %v1265 = vadd.f32 0.0, %v1264
        %v1266 = vpop.f32.mrb[0].mxu0
        %v1267 = vpop.f32.mrb[0].mxu0
        %v1268 = vadd.f32 0.0, %v1267
        %v1269 = vpop.f32.mrb[0].mxu0
        %1270 = vdwg.mxu0
        %v1271 = vmul.f32 %v1241, 0.17677669
        %v1272 = vmul.f32 %v1244, 0.17677669
        %v1273 = vmul.f32 %v1249, 0.17677669
        %v1274 = vmul.f32 %v1252, 0.17677669
        %v1275 = vmul.f32 %v1257, 0.17677669
        %v1276 = vmul.f32 %v1260, 0.17677669
        %v1277 = vmul.f32 %v1265, 0.17677669
        %v1278 = vmul.f32 %v1268, 0.17677669
        %v1279 = vld [vmem:[%s3] sm:$0xff]
        %v1280 = vld [vmem:[%s3 + $0x8] sm:$0xff]
        %v1281 = vld [vmem:[%s3 + $0x10] sm:$0xff]
        %v1282 = vld [vmem:[%s3 + $0x18] sm:$0xff]
        %v1283 = vld [vmem:[%s3 + $0x20] sm:$0xff]
        %v1284 = vld [vmem:[%s3 + $0x28] sm:$0xff]
        %v1285 = vld [vmem:[%s3 + $0x30] sm:$0xff]
        %v1286 = vld [vmem:[%s3 + $0x38] sm:$0xff]
        %v1287 = vadd.f32 %v1271, %v1279
        %v1288 = vadd.f32 %v1272, %v1280
        %v1289 = vadd.f32 %v1273, %v1281
        %v1290 = vadd.f32 %v1274, %v1282
        %v1291 = vadd.f32 %v1275, %v1283
        %v1292 = vadd.f32 %v1276, %v1284
        %v1293 = vadd.f32 %v1277, %v1285
        %v1294 = vadd.f32 %v1278, %v1286
        %vm1295 = vcmask 523264
        %v1296 = vsel %vm1295, %v1287, -inf
        %1297 = vmax.xlane.f32.xlu0 %v1296
        %v1298 = vpop.xlane.xlu0 %1297
        %v1299 = vsel %vm1295, %v1288, -inf
        %1300 = vmax.xlane.f32.xlu0 %v1299
        %v1301 = vpop.xlane.xlu0 %1300
        %v1302 = vsel %vm1295, %v1289, -inf
        %1303 = vmax.xlane.f32.xlu0 %v1302
        %v1304 = vpop.xlane.xlu0 %1303
        %v1305 = vsel %vm1295, %v1290, -inf
        %1306 = vmax.xlane.f32.xlu0 %v1305
        %v1307 = vpop.xlane.xlu0 %1306
        %v1308 = vsel %vm1295, %v1291, -inf
        %1309 = vmax.xlane.f32.xlu0 %v1308
        %v1310 = vpop.xlane.xlu0 %1309
        %v1311 = vsel %vm1295, %v1292, -inf
        %1312 = vmax.xlane.f32.xlu0 %v1311
        %v1313 = vpop.xlane.xlu0 %1312
        %v1314 = vsel %vm1295, %v1293, -inf
        %1315 = vmax.xlane.f32.xlu0 %v1314
        %v1316 = vpop.xlane.xlu0 %1315
        %v1317 = vsel %vm1295, %v1294, -inf
        %1318 = vmax.xlane.f32.xlu0 %v1317
        %v1319 = vpop.xlane.xlu0 %1318
        %v1320 = vsub.f32 %v1287, %v1298
        %v1321 = vsub.f32 %v1288, %v1301
        %v1322 = vsub.f32 %v1289, %v1304
        %v1323 = vsub.f32 %v1290, %v1307
        %v1324 = vsub.f32 %v1291, %v1310
        %v1325 = vsub.f32 %v1292, %v1313
        %v1326 = vsub.f32 %v1293, %v1316
        %v1327 = vsub.f32 %v1294, %v1319
        %v1328 = vmul.f32 %v1320, 1.442695
        %v1329 = vpow.pop %v1328
        %v1330 = vmul.f32 %v1321, 1.442695
        %v1331 = vpow.pop %v1330
        %v1332 = vmul.f32 %v1322, 1.442695
        %v1333 = vpow.pop %v1332
        %v1334 = vmul.f32 %v1323, 1.442695
        %v1335 = vpow.pop %v1334
        %v1336 = vmul.f32 %v1324, 1.442695
        %v1337 = vpow.pop %v1336
        %v1338 = vmul.f32 %v1325, 1.442695
        %v1339 = vpow.pop %v1338
        %v1340 = vmul.f32 %v1326, 1.442695
        %v1341 = vpow.pop %v1340
        %v1342 = vmul.f32 %v1327, 1.442695
        %v1343 = vpow.pop %v1342
        %v1344 = vsel %vm1295, %v1329, 0.0
        %1345 = vadd.xlane.f32.xlu0 %v1344
        %v1346 = vpop.xlane.xlu0 %1345
        %v1347 = vsel %vm1295, %v1331, 0.0
        %1348 = vadd.xlane.f32.xlu0 %v1347
        %v1349 = vpop.xlane.xlu0 %1348
        %v1350 = vsel %vm1295, %v1333, 0.0
        %1351 = vadd.xlane.f32.xlu0 %v1350
        %v1352 = vpop.xlane.xlu0 %1351
        %v1353 = vsel %vm1295, %v1335, 0.0
        %1354 = vadd.xlane.f32.xlu0 %v1353
        %v1355 = vpop.xlane.xlu0 %1354
        %v1356 = vsel %vm1295, %v1337, 0.0
        %1357 = vadd.xlane.f32.xlu0 %v1356
        %v1358 = vpop.xlane.xlu0 %1357
        %v1359 = vsel %vm1295, %v1339, 0.0
        %1360 = vadd.xlane.f32.xlu0 %v1359
        %v1361 = vpop.xlane.xlu0 %1360
        %v1362 = vsel %vm1295, %v1341, 0.0
        %1363 = vadd.xlane.f32.xlu0 %v1362
        %v1364 = vpop.xlane.xlu0 %1363
        %v1365 = vsel %vm1295, %v1343, 0.0
        %1366 = vadd.xlane.f32.xlu0 %v1365
        %v1367 = vpop.xlane.xlu0 %1366
        %v1368 = vrcp.pop %v1346
        %v1369 = vrcp.pop %v1349
        %v1370 = vrcp.pop %v1352
        %v1371 = vrcp.pop %v1355
        %v1372 = vrcp.pop %v1358
        %v1373 = vrcp.pop %v1361
        %v1374 = vrcp.pop %v1364
        %v1375 = vrcp.pop %v1367
        %v1376 = vmul.f32 %v1329, %v1368
        %v1377 = vmul.f32 %v1331, %v1369
        %v1378 = vmul.f32 %v1333, %v1370
        %v1379 = vmul.f32 %v1335, %v1371
        %v1380 = vmul.f32 %v1337, %v1372
        %v1381 = vmul.f32 %v1339, %v1373
        %v1382 = vmul.f32 %v1341, %v1374
        %v1383 = vmul.f32 %v1343, %v1375
        %v1384 = vpack.c.bf16 %v1377, %v1376
        %v1385 = vpack.c.bf16 %v1379, %v1378
        %v1386 = vpack.c.bf16 %v1381, %v1380
        %v1387 = vpack.c.bf16 %v1383, %v1382
        %v1389 = vsel %vm1295, %v1384, 0
        %v1392 = vsel %vm1295, %v1385, 0
        %v1395 = vsel %vm1295, %v1386, 0
        %v1398 = vsel %vm1295, %v1387, 0
        %1400 = vmatprep.subr.bf16.mxu0 0
        %1401 = vmatpush1.bf16.msra.mxu0 %v1177
        %1402 = vmatprep.subr.bf16.mxu0 0
        %1403 = vmatpush1.bf16.msra.mxu0 %v1178
        %1404 = vmatprep.subr.bf16.mxu0 0
        %1405 = vmatpush1.bf16.msra.mxu0 %v1179
        %1406 = vmatprep.subr.bf16.mxu0 0
        %1407 = vmatpush1.bf16.msra.mxu0 %v1180
        %1408 = vmatprep.subr.bf16.mxu0 0
        %1409 = vmatpush1.bf16.msra.mxu0 0
        %1410 = vmatprep.subr.bf16.mxu0 0
        %1411 = vmatpush1.bf16.msra.mxu0 0
        %1412 = vmatprep.subr.bf16.mxu0 0
        %1413 = vmatpush1.bf16.msra.mxu0 0
        %1414 = vmatprep.subr.bf16.mxu0 0
        %1415 = vmatpush1.bf16.msra.mxu0 0
        %1416 = vmatprep.subr.bf16.mxu0 0
        %1417 = vmatpush1.bf16.msra.mxu0 0
        %1418 = vmatprep.subr.bf16.mxu0 0
        %1419 = vmatpush1.bf16.msra.mxu0 0
        %1420 = vmatprep.subr.bf16.mxu0 0
        %1421 = vmatpush1.bf16.msra.mxu0 0
        %1422 = vmatprep.subr.bf16.mxu0 0
        %1423 = vmatpush1.bf16.msra.mxu0 0
        %1424 = vmatprep.subr.bf16.mxu0 0
        %1425 = vmatpush1.bf16.msra.mxu0 0
        %1426 = vmatprep.subr.bf16.mxu0 0
        %1427 = vmatpush1.bf16.msra.mxu0 0
        %1428 = vmatprep.subr.bf16.mxu0 0
        %1429 = vmatpush1.bf16.msra.mxu0 0
        %1430 = vmatprep.subr.bf16.mxu0 0
        %1431 = vmatpush1.bf16.msra.mxu0 0
        %1432 = vmatprep.mubr.bf16.mxu0 0
        %1433 = vmatmul.mubr.bf16.gmra.mrb[0].mxu0 %v1389
        %v1434 = vpop.f32.mrb[0].mxu0
        %v1435 = vadd.f32 0.0, %v1434
        %v1436 = vpop.f32.mrb[0].mxu0
        %v1437 = vpop.f32.mrb[0].mxu0
        %v1438 = vadd.f32 0.0, %v1437
        %v1439 = vpop.f32.mrb[0].mxu0
        %1440 = vmatprep.mubr.bf16.mxu0 0
        %1441 = vmatmul.mubr.bf16.gmra.mrb[0].mxu0 %v1392
        %v1442 = vpop.f32.mrb[0].mxu0
        %v1443 = vadd.f32 0.0, %v1442
        %v1444 = vpop.f32.mrb[0].mxu0
        %v1445 = vpop.f32.mrb[0].mxu0
        %v1446 = vadd.f32 0.0, %v1445
        %v1447 = vpop.f32.mrb[0].mxu0
        %1448 = vmatprep.mubr.bf16.mxu0 0
        %1449 = vmatmul.mubr.bf16.gmra.mrb[0].mxu0 %v1395
        %v1450 = vpop.f32.mrb[0].mxu0
        %v1451 = vadd.f32 0.0, %v1450
        %v1452 = vpop.f32.mrb[0].mxu0
        %v1453 = vpop.f32.mrb[0].mxu0
        %v1454 = vadd.f32 0.0, %v1453
        %v1455 = vpop.f32.mrb[0].mxu0
        %1456 = vmatprep.mubr.bf16.mxu0 0
        %1457 = vmatmul.mubr.bf16.gmra.mrb[0].mxu0 %v1398
        %v1458 = vpop.f32.mrb[0].mxu0
        %v1459 = vadd.f32 0.0, %v1458
        %v1460 = vpop.f32.mrb[0].mxu0
        %v1461 = vpop.f32.mrb[0].mxu0
        %v1462 = vadd.f32 0.0, %v1461
        %v1463 = vpop.f32.mrb[0].mxu0
        %1464 = vdwg.mxu0
        %1466 = vrot.lane.b32.xlu0 %v1438, 32
        %v1467 = vpop.permute.xlu0 %1466
        %1470 = vrot.lane.b32.xlu0 %v1443, 64
        %v1471 = vpop.permute.xlu0 %1470
        %1474 = vrot.lane.b32.xlu0 %v1446, 96
        %v1475 = vpop.permute.xlu0 %1474
        %v1477 = vsel %vm1181, %v1435, %v1467
        %v1478 = vsel %vm1295, %v1477, %v1471
        %vm1479 = vcmask 785408
        %v1480 = vsel %vm1479, %v1478, %v1475
        %1482 = vrot.lane.b32.xlu0 %v1454, 32
        %v1483 = vpop.permute.xlu0 %1482
        %1486 = vrot.lane.b32.xlu0 %v1459, 64
        %v1487 = vpop.permute.xlu0 %1486
        %1490 = vrot.lane.b32.xlu0 %v1462, 96
        %v1491 = vpop.permute.xlu0 %1490
        %v1493 = vsel %vm1181, %v1451, %v1483
        %v1494 = vsel %vm1295, %v1493, %v1487
        %v1495 = vsel %vm1479, %v1494, %v1491
        %v1496 = vld [vmem:[%s764] sm:$0x1]
        %v1497 = vpack.c.bf16 %v1495, %v1480
        %v1498 = vld [vmem:[%s761] sm:$0xf]
        %v1499 = vld [vmem:[%s761 + $0x4] sm:$0xf]
        %v1500 = vld [vmem:[%s761 + $0x8] sm:$0xf]
        %v1501 = vld [vmem:[%s761 + $0xc] sm:$0xf]
        %v1502 = vld [vmem:[%s761 + $0x10] sm:$0xf]
        %v1503 = vld [vmem:[%s761 + $0x14] sm:$0xf]
        %v1504 = vld [vmem:[%s761 + $0x18] sm:$0xf]
        %v1505 = vld [vmem:[%s761 + $0x1c] sm:$0xf]
        %v1506 = vld [vmem:[%s761 + $0x20] sm:$0xf]
        %v1507 = vld [vmem:[%s761 + $0x24] sm:$0xf]
        %v1508 = vld [vmem:[%s761 + $0x28] sm:$0xf]
        %v1509 = vld [vmem:[%s761 + $0x2c] sm:$0xf]
        %v1510 = vld [vmem:[%s761 + $0x30] sm:$0xf]
        %v1511 = vld [vmem:[%s761 + $0x34] sm:$0xf]
        %v1512 = vld [vmem:[%s761 + $0x38] sm:$0xf]
        %v1513 = vld [vmem:[%s761 + $0x3c] sm:$0xf]
        %v1515 = vlaneseq
        %v1516 = vshrl.u32 %v1515, 7
        %v1517 = vsub.s32 0, %v1516
        %v1518 = vrot.slane %v1496, %v1517
        %v1536 = vunpack.c.l.b16 %v1498
        %v1537 = vunpack.c.l.b16 %v1499
        %v1538 = vunpack.c.l.b16 %v1500
        %v1539 = vunpack.c.l.b16 %v1501
        %v1540 = vunpack.c.l.b16 %v1502
        %v1541 = vunpack.c.l.b16 %v1503
        %v1542 = vunpack.c.l.b16 %v1504
        %v1543 = vunpack.c.l.b16 %v1505
        %v1544 = vunpack.c.l.b16 %v1506
        %v1545 = vunpack.c.l.b16 %v1507
        %v1546 = vunpack.c.l.b16 %v1508
        %v1547 = vunpack.c.l.b16 %v1509
        %v1548 = vunpack.c.l.b16 %v1510
        %v1549 = vunpack.c.l.b16 %v1511
        %v1550 = vunpack.c.l.b16 %v1512
        %v1551 = vunpack.c.l.b16 %v1513
        %v1552 = vpack.c.b16 %v1537, %v1536
        %v1553 = vpack.c.b16 %v1539, %v1538
        %v1554 = vpack.c.b16 %v1541, %v1540
        %v1555 = vpack.c.b16 %v1543, %v1542
        %v1556 = vpack.c.b16 %v1545, %v1544
        %v1557 = vpack.c.b16 %v1547, %v1546
        %v1558 = vpack.c.b16 %v1549, %v1548
        %v1559 = vpack.c.b16 %v1551, %v1550
        %1568 = vmatprep.subr.bf16.mxu0 0
        %1569 = vmatpush1.bf16.msra.mxu0 %v1552
        %1570 = vmatprep.subr.bf16.mxu0 0
        %1571 = vmatpush1.bf16.msra.mxu0 %v1553
        %1572 = vmatprep.subr.bf16.mxu0 0
        %1573 = vmatpush1.bf16.msra.mxu0 %v1554
        %1574 = vmatprep.subr.bf16.mxu0 0
        %1575 = vmatpush1.bf16.msra.mxu0 %v1555
        %1576 = vmatprep.subr.bf16.mxu0 0
        %1577 = vmatpush1.bf16.msra.mxu0 %v1556
        %1578 = vmatprep.subr.bf16.mxu0 0
        %1579 = vmatpush1.bf16.msra.mxu0 %v1557
        %1580 = vmatprep.subr.bf16.mxu0 0
        %1581 = vmatpush1.bf16.msra.mxu0 %v1558
        %1582 = vmatprep.subr.bf16.mxu0 0
        %1583 = vmatpush1.bf16.msra.mxu0 %v1559
        %1584 = vmatprep.subr.bf16.mxu0 0
        %1585 = vmatpush1.bf16.msra.mxu0 0
        %1586 = vmatprep.subr.bf16.mxu0 0
        %1587 = vmatpush1.bf16.msra.mxu0 0
        %1588 = vmatprep.subr.bf16.mxu0 0
        %1589 = vmatpush1.bf16.msra.mxu0 0
        %1590 = vmatprep.subr.bf16.mxu0 0
        %1591 = vmatpush1.bf16.msra.mxu0 0
        %1592 = vmatprep.subr.bf16.mxu0 0
        %1593 = vmatpush1.bf16.msra.mxu0 0
        %1594 = vmatprep.subr.bf16.mxu0 0
        %1595 = vmatpush1.bf16.msra.mxu0 0
        %1596 = vmatprep.subr.bf16.mxu0 0
        %1597 = vmatpush1.bf16.msra.mxu0 0
        %1598 = vmatprep.subr.bf16.mxu0 0
        %1599 = vmatpush1.bf16.msra.mxu0 0
        %1600 = vmatprep.mubr.bf16.mxu0 0
        %1601 = vmatmul.mubr.bf16.gmra.mrb[0].mxu0 %v1497
        %v1602 = vpop.f32.mrb[0].mxu0
        %v1603 = vadd.f32 %v1518, %v1602
        %v1604 = vpop.f32.mrb[0].mxu0
        %v1605 = vpop.f32.mrb[0].mxu0
        %v1606 = vadd.f32 %v1518, %v1605
        %v1607 = vpop.f32.mrb[0].mxu0
        %1608 = vdwg.mxu0
        %v1609 = vadd.f32 %v845, %v1603
        %v1610 = vadd.f32 %v846, %v1606
        %v1611 = vld [vmem:[%s767] sm:$0x1]
        %v1612 = vld [vmem:[%s770] sm:$0x1]
        %1613 = vadd.xlane.f32.xlu0 %v1609
        %v1614 = vpop.xlane.xlu0 %1613
        %1615 = vadd.xlane.f32.xlu0 %v1610
        %v1616 = vpop.xlane.xlu0 %1615
        %v1617 = vrcp.pop 128.0
        %v1618 = vmul.f32 %v1614, %v1617
        %v1619 = vmul.f32 %v1616, %v1617
        %v1620 = vsub.f32 %v1609, %v1618
        %v1621 = vsub.f32 %v1610, %v1619
        %v1622 = vmul.f32 %v1620, %v1620
        %v1623 = vmul.f32 %v1621, %v1621
        %1624 = vadd.xlane.f32.xlu0 %v1622
        %v1625 = vpop.xlane.xlu0 %1624
        %1626 = vadd.xlane.f32.xlu0 %v1623
        %v1627 = vpop.xlane.xlu0 %1626
        %v1628 = vmul.f32 %v1625, %v1617
        %v1629 = vmul.f32 %v1627, %v1617
        %v1630 = vadd.f32 %v1628, 1e-12
        %v1631 = vadd.f32 %v1629, 1e-12
        %v1632 = vrsqrt.pop %v1630
        %v1633 = vrsqrt.pop %v1631
        %v1634 = vmul.f32 %v1620, %v1632
        %v1635 = vmul.f32 %v1621, %v1633
        %v1637 = vlaneseq
        %v1638 = vshrl.u32 %v1637, 7
        %v1639 = vsub.s32 0, %v1638
        %v1640 = vrot.slane %v1611, %v1639
        %v1642 = vmul.f32 %v1634, %v1640
        %v1643 = vmul.f32 %v1635, %v1640
        %v1645 = vlaneseq
        %v1646 = vshrl.u32 %v1645, 7
        %v1647 = vsub.s32 0, %v1646
        %v1648 = vrot.slane %v1612, %v1647
        %v1650 = vadd.f32 %v1642, %v1648
        %v1651 = vadd.f32 %v1643, %v1648
        %v1652 = vld [vmem:[%s779] sm:$0x3]
        %v1653 = vpack.c.bf16 %v1651, %v1650
        %v1654 = vld [vmem:[%s775] sm:$0xff]
        %v1655 = vld [vmem:[%s775 + $0x8] sm:$0xff]
        %v1656 = vld [vmem:[%s775 + $0x10] sm:$0xff]
        %v1657 = vld [vmem:[%s775 + $0x18] sm:$0xff]
        %v1658 = vld [vmem:[%s775 + $0x20] sm:$0xff]
        %v1659 = vld [vmem:[%s775 + $0x28] sm:$0xff]
        %v1660 = vld [vmem:[%s775 + $0x30] sm:$0xff]
        %v1661 = vld [vmem:[%s775 + $0x38] sm:$0xff]
        %v1662 = vld [vmem:[%s775 + $0x40] sm:$0xff]
        %v1663 = vld [vmem:[%s775 + $0x48] sm:$0xff]
        %v1664 = vld [vmem:[%s775 + $0x50] sm:$0xff]
        %v1665 = vld [vmem:[%s775 + $0x58] sm:$0xff]
        %v1666 = vld [vmem:[%s775 + $0x60] sm:$0xff]
        %v1667 = vld [vmem:[%s775 + $0x68] sm:$0xff]
        %v1668 = vld [vmem:[%s775 + $0x70] sm:$0xff]
        %v1669 = vld [vmem:[%s775 + $0x78] sm:$0xff]
        %v1671 = vlaneseq
        %v1672 = vshrl.u32 %v1671, 7
        %v1673 = vsub.s32 0, %v1672
        %v1674 = vrot.slane %v1652, %v1673
        %v1675 = vlaneseq
        %v1676 = vshrl.u32 %v1675, 7
        %v1677 = vsub.s32 1, %v1676
        %v1678 = vrot.slane %v1652, %v1677
        %v1697 = vunpack.c.l.b16 %v1654
        %v1698 = vunpack.c.h.b16 %v1654
        %v1699 = vunpack.c.l.b16 %v1655
        %v1700 = vunpack.c.h.b16 %v1655
        %v1701 = vunpack.c.l.b16 %v1656
        %v1702 = vunpack.c.h.b16 %v1656
        %v1703 = vunpack.c.l.b16 %v1657
        %v1704 = vunpack.c.h.b16 %v1657
        %v1705 = vunpack.c.l.b16 %v1658
        %v1706 = vunpack.c.h.b16 %v1658
        %v1707 = vunpack.c.l.b16 %v1659
        %v1708 = vunpack.c.h.b16 %v1659
        %v1709 = vunpack.c.l.b16 %v1660
        %v1710 = vunpack.c.h.b16 %v1660
        %v1711 = vunpack.c.l.b16 %v1661
        %v1712 = vunpack.c.h.b16 %v1661
        %v1713 = vunpack.c.l.b16 %v1662
        %v1714 = vunpack.c.h.b16 %v1662
        %v1715 = vunpack.c.l.b16 %v1663
        %v1716 = vunpack.c.h.b16 %v1663
        %v1717 = vunpack.c.l.b16 %v1664
        %v1718 = vunpack.c.h.b16 %v1664
        %v1719 = vunpack.c.l.b16 %v1665
        %v1720 = vunpack.c.h.b16 %v1665
        %v1721 = vunpack.c.l.b16 %v1666
        %v1722 = vunpack.c.h.b16 %v1666
        %v1723 = vunpack.c.l.b16 %v1667
        %v1724 = vunpack.c.h.b16 %v1667
        %v1725 = vunpack.c.l.b16 %v1668
        %v1726 = vunpack.c.h.b16 %v1668
        %v1727 = vunpack.c.l.b16 %v1669
        %v1728 = vunpack.c.h.b16 %v1669
        %v1729 = vpack.c.b16 %v1699, %v1697
        %v1730 = vpack.c.b16 %v1700, %v1698
        %v1731 = vpack.c.b16 %v1703, %v1701
        %v1732 = vpack.c.b16 %v1704, %v1702
        %v1733 = vpack.c.b16 %v1707, %v1705
        %v1734 = vpack.c.b16 %v1708, %v1706
        %v1735 = vpack.c.b16 %v1711, %v1709
        %v1736 = vpack.c.b16 %v1712, %v1710
        %v1737 = vpack.c.b16 %v1715, %v1713
        %v1738 = vpack.c.b16 %v1716, %v1714
        %v1739 = vpack.c.b16 %v1719, %v1717
        %v1740 = vpack.c.b16 %v1720, %v1718
        %v1741 = vpack.c.b16 %v1723, %v1721
        %v1742 = vpack.c.b16 %v1724, %v1722
        %v1743 = vpack.c.b16 %v1727, %v1725
        %v1744 = vpack.c.b16 %v1728, %v1726
        %1761 = vmatprep.subr.bf16.mxu0 %v1730
        %1762 = vmatpush1.bf16.msra.mxu0 %v1729
        %1763 = vmatprep.subr.bf16.mxu0 %v1732
        %1764 = vmatpush1.bf16.msra.mxu0 %v1731
        %1765 = vmatprep.subr.bf16.mxu0 %v1734
        %1766 = vmatpush1.bf16.msra.mxu0 %v1733
        %1767 = vmatprep.subr.bf16.mxu0 %v1736
        %1768 = vmatpush1.bf16.msra.mxu0 %v1735
        %1769 = vmatprep.subr.bf16.mxu0 %v1738
        %1770 = vmatpush1.bf16.msra.mxu0 %v1737
        %1771 = vmatprep.subr.bf16.mxu0 %v1740
        %1772 = vmatpush1.bf16.msra.mxu0 %v1739
        %1773 = vmatprep.subr.bf16.mxu0 %v1742
        %1774 = vmatpush1.bf16.msra.mxu0 %v1741
        %1775 = vmatprep.subr.bf16.mxu0 %v1744
        %1776 = vmatpush1.bf16.msra.mxu0 %v1743
        %1777 = vmatprep.subr.bf16.mxu0 0
        %1778 = vmatpush1.bf16.msra.mxu0 0
        %1779 = vmatprep.subr.bf16.mxu0 0
        %1780 = vmatpush1.bf16.msra.mxu0 0
        %1781 = vmatprep.subr.bf16.mxu0 0
        %1782 = vmatpush1.bf16.msra.mxu0 0
        %1783 = vmatprep.subr.bf16.mxu0 0
        %1784 = vmatpush1.bf16.msra.mxu0 0
        %1785 = vmatprep.subr.bf16.mxu0 0
        %1786 = vmatpush1.bf16.msra.mxu0 0
        %1787 = vmatprep.subr.bf16.mxu0 0
        %1788 = vmatpush1.bf16.msra.mxu0 0
        %1789 = vmatprep.subr.bf16.mxu0 0
        %1790 = vmatpush1.bf16.msra.mxu0 0
        %1791 = vmatprep.subr.bf16.mxu0 0
        %1792 = vmatpush1.bf16.msra.mxu0 0
        %1793 = vmatprep.mubr.bf16.mxu0 0
        %1794 = vmatmul.mubr.bf16.gmra.mrb[0].mxu0 %v1653
        %v1795 = vpop.f32.mrb[0].mxu0
        %v1796 = vadd.f32 %v1674, %v1795
        %v1797 = vpop.f32.mrb[0].mxu0
        %v1798 = vadd.f32 %v1678, %v1797
        %v1799 = vpop.f32.mrb[0].mxu0
        %v1800 = vadd.f32 %v1674, %v1799
        %v1801 = vpop.f32.mrb[0].mxu0
        %v1802 = vadd.f32 %v1678, %v1801
        %1803 = vdwg.mxu0
        %v1804 = vmul.f32 %v1796, 0.5
        %v1805 = vmul.f32 %v1798, 0.5
        %v1806 = vmul.f32 %v1800, 0.5
        %v1807 = vmul.f32 %v1802, 0.5
        %v1808 = vmul.f32 %v1796, 0.044715
        %v1809 = vmul.f32 %v1798, 0.044715
        %v1810 = vmul.f32 %v1800, 0.044715
        %v1811 = vmul.f32 %v1802, 0.044715
        %v1812 = vmul.f32 %v1808, %v1796
        %v1813 = vmul.f32 %v1809, %v1798
        %v1814 = vmul.f32 %v1810, %v1800
        %v1815 = vmul.f32 %v1811, %v1802
        %v1816 = vmul.f32 %v1812, %v1796
        %v1817 = vmul.f32 %v1813, %v1798
        %v1818 = vmul.f32 %v1814, %v1800
        %v1819 = vmul.f32 %v1815, %v1802
        %v1820 = vadd.f32 %v1796, %v1816
        %v1821 = vadd.f32 %v1798, %v1817
        %v1822 = vadd.f32 %v1800, %v1818
        %v1823 = vadd.f32 %v1802, %v1819
        %v1824 = vmul.f32 %v1820, 0.7978846
        %v1825 = vmul.f32 %v1821, 0.7978846
        %v1826 = vmul.f32 %v1822, 0.7978846
        %v1827 = vmul.f32 %v1823, 0.7978846
        %v1828 = vtanh.pop %v1824
        %v1829 = vtanh.pop %v1825
        %v1830 = vtanh.pop %v1826
        %v1831 = vtanh.pop %v1827
        %v1832 = vadd.f32 %v1828, 1.0
        %v1833 = vadd.f32 %v1829, 1.0
        %v1834 = vadd.f32 %v1830, 1.0
        %v1835 = vadd.f32 %v1831, 1.0
        %v1836 = vmul.f32 %v1804, %v1832
        %v1837 = vmul.f32 %v1805, %v1833
        %v1838 = vmul.f32 %v1806, %v1834
        %v1839 = vmul.f32 %v1807, %v1835
        %v1840 = vld [vmem:[%s787] sm:$0x1]
        %v1841 = vpack.c.bf16 %v1838, %v1836
        %v1842 = vpack.c.bf16 %v1839, %v1837
        %v1843 = vld [vmem:[%s784] sm:$0xf]
        %v1844 = vld [vmem:[%s784 + $0x4] sm:$0xf]
        %v1845 = vld [vmem:[%s784 + $0x8] sm:$0xf]
        %v1846 = vld [vmem:[%s784 + $0xc] sm:$0xf]
        %v1847 = vld [vmem:[%s784 + $0x10] sm:$0xf]
        %v1848 = vld [vmem:[%s784 + $0x14] sm:$0xf]
        %v1849 = vld [vmem:[%s784 + $0x18] sm:$0xf]
        %v1850 = vld [vmem:[%s784 + $0x1c] sm:$0xf]
        %v1851 = vld [vmem:[%s784 + $0x20] sm:$0xf]
        %v1852 = vld [vmem:[%s784 + $0x24] sm:$0xf]
        %v1853 = vld [vmem:[%s784 + $0x28] sm:$0xf]
        %v1854 = vld [vmem:[%s784 + $0x2c] sm:$0xf]
        %v1855 = vld [vmem:[%s784 + $0x30] sm:$0xf]
        %v1856 = vld [vmem:[%s784 + $0x34] sm:$0xf]
        %v1857 = vld [vmem:[%s784 + $0x38] sm:$0xf]
        %v1858 = vld [vmem:[%s784 + $0x3c] sm:$0xf]
        %v1859 = vld [vmem:[%s784 + $0x40] sm:$0xf]
        %v1860 = vld [vmem:[%s784 + $0x44] sm:$0xf]
        %v1861 = vld [vmem:[%s784 + $0x48] sm:$0xf]
        %v1862 = vld [vmem:[%s784 + $0x4c] sm:$0xf]
        %v1863 = vld [vmem:[%s784 + $0x50] sm:$0xf]
        %v1864 = vld [vmem:[%s784 + $0x54] sm:$0xf]
        %v1865 = vld [vmem:[%s784 + $0x58] sm:$0xf]
        %v1866 = vld [vmem:[%s784 + $0x5c] sm:$0xf]
        %v1867 = vld [vmem:[%s784 + $0x60] sm:$0xf]
        %v1868 = vld [vmem:[%s784 + $0x64] sm:$0xf]
        %v1869 = vld [vmem:[%s784 + $0x68] sm:$0xf]
        %v1870 = vld [vmem:[%s784 + $0x6c] sm:$0xf]
        %v1871 = vld [vmem:[%s784 + $0x70] sm:$0xf]
        %v1872 = vld [vmem:[%s784 + $0x74] sm:$0xf]
        %v1873 = vld [vmem:[%s784 + $0x78] sm:$0xf]
        %v1874 = vld [vmem:[%s784 + $0x7c] sm:$0xf]
        %v1876 = vlaneseq
        %v1877 = vshrl.u32 %v1876, 7
        %v1878 = vsub.s32 0, %v1877
        %v1879 = vrot.slane %v1840, %v1878
        %v1913 = vunpack.c.l.b16 %v1843
        %v1914 = vunpack.c.l.b16 %v1844
        %v1915 = vunpack.c.l.b16 %v1845
        %v1916 = vunpack.c.l.b16 %v1846
        %v1917 = vunpack.c.l.b16 %v1847
        %v1918 = vunpack.c.l.b16 %v1848
        %v1919 = vunpack.c.l.b16 %v1849
        %v1920 = vunpack.c.l.b16 %v1850
        %v1921 = vunpack.c.l.b16 %v1851
        %v1922 = vunpack.c.l.b16 %v1852
        %v1923 = vunpack.c.l.b16 %v1853
        %v1924 = vunpack.c.l.b16 %v1854
        %v1925 = vunpack.c.l.b16 %v1855
        %v1926 = vunpack.c.l.b16 %v1856
        %v1927 = vunpack.c.l.b16 %v1857
        %v1928 = vunpack.c.l.b16 %v1858
        %v1929 = vunpack.c.l.b16 %v1859
        %v1930 = vunpack.c.l.b16 %v1860
        %v1931 = vunpack.c.l.b16 %v1861
        %v1932 = vunpack.c.l.b16 %v1862
        %v1933 = vunpack.c.l.b16 %v1863
        %v1934 = vunpack.c.l.b16 %v1864
        %v1935 = vunpack.c.l.b16 %v1865
        %v1936 = vunpack.c.l.b16 %v1866
        %v1937 = vunpack.c.l.b16 %v1867
        %v1938 = vunpack.c.l.b16 %v1868
        %v1939 = vunpack.c.l.b16 %v1869
        %v1940 = vunpack.c.l.b16 %v1870
        %v1941 = vunpack.c.l.b16 %v1871
        %v1942 = vunpack.c.l.b16 %v1872
        %v1943 = vunpack.c.l.b16 %v1873
        %v1944 = vunpack.c.l.b16 %v1874
        %v1945 = vpack.c.b16 %v1914, %v1913
        %v1946 = vpack.c.b16 %v1916, %v1915
        %v1947 = vpack.c.b16 %v1918, %v1917
        %v1948 = vpack.c.b16 %v1920, %v1919
        %v1949 = vpack.c.b16 %v1922, %v1921
        %v1950 = vpack.c.b16 %v1924, %v1923
        %v1951 = vpack.c.b16 %v1926, %v1925
        %v1952 = vpack.c.b16 %v1928, %v1927
        %v1953 = vpack.c.b16 %v1930, %v1929
        %v1954 = vpack.c.b16 %v1932, %v1931
        %v1955 = vpack.c.b16 %v1934, %v1933
        %v1956 = vpack.c.b16 %v1936, %v1935
        %v1957 = vpack.c.b16 %v1938, %v1937
        %v1958 = vpack.c.b16 %v1940, %v1939
        %v1959 = vpack.c.b16 %v1942, %v1941
        %v1960 = vpack.c.b16 %v1944, %v1943
        %1977 = vmatprep.subr.bf16.mxu0 0
        %1978 = vmatpush1.bf16.msra.mxu0 %v1945
        %1979 = vmatprep.subr.bf16.mxu0 0
        %1980 = vmatpush1.bf16.msra.mxu0 %v1946
        %1981 = vmatprep.subr.bf16.mxu0 0
        %1982 = vmatpush1.bf16.msra.mxu0 %v1947
        %1983 = vmatprep.subr.bf16.mxu0 0
        %1984 = vmatpush1.bf16.msra.mxu0 %v1948
        %1985 = vmatprep.subr.bf16.mxu0 0
        %1986 = vmatpush1.bf16.msra.mxu0 %v1949
        %1987 = vmatprep.subr.bf16.mxu0 0
        %1988 = vmatpush1.bf16.msra.mxu0 %v1950
        %1989 = vmatprep.subr.bf16.mxu0 0
        %1990 = vmatpush1.bf16.msra.mxu0 %v1951
        %1991 = vmatprep.subr.bf16.mxu0 0
        %1992 = vmatpush1.bf16.msra.mxu0 %v1952
        %1993 = vmatprep.subr.bf16.mxu0 0
        %1994 = vmatpush1.bf16.msra.mxu0 %v1953
        %1995 = vmatprep.subr.bf16.mxu0 0
        %1996 = vmatpush1.bf16.msra.mxu0 %v1954
        %1997 = vmatprep.subr.bf16.mxu0 0
        %1998 = vmatpush1.bf16.msra.mxu0 %v1955
        %1999 = vmatprep.subr.bf16.mxu0 0
        %2000 = vmatpush1.bf16.msra.mxu0 %v1956
        %2001 = vmatprep.subr.bf16.mxu0 0
        %2002 = vmatpush1.bf16.msra.mxu0 %v1957
        %2003 = vmatprep.subr.bf16.mxu0 0
        %2004 = vmatpush1.bf16.msra.mxu0 %v1958
        %2005 = vmatprep.subr.bf16.mxu0 0
        %2006 = vmatpush1.bf16.msra.mxu0 %v1959
        %2007 = vmatprep.subr.bf16.mxu0 0
        %2008 = vmatpush1.bf16.msra.mxu0 %v1960
        %2009 = vmatprep.mubr.bf16.mxu0 %v1842
        %2010 = vmatmul.mubr.bf16.gmra.mrb[0].mxu0 %v1841
        %v2011 = vpop.f32.mrb[0].mxu0
        %v2012 = vadd.f32 %v1879, %v2011
        %v2013 = vpop.f32.mrb[0].mxu0
        %v2014 = vpop.f32.mrb[0].mxu0
        %v2015 = vadd.f32 %v1879, %v2014
        %v2016 = vpop.f32.mrb[0].mxu0
        %2017 = vdwg.mxu0
        %v2018 = vadd.f32 %v1650, %v2012
        %v2019 = vadd.f32 %v1651, %v2015
        %v2020 = vld [vmem:[%s790] sm:$0x1]
        %v2021 = vld [vmem:[%s793] sm:$0x1]
        %2022 = vadd.xlane.f32.xlu0 %v2018
        %v2023 = vpop.xlane.xlu0 %2022
        %2024 = vadd.xlane.f32.xlu0 %v2019
        %v2025 = vpop.xlane.xlu0 %2024
        %v2026 = vmul.f32 %v2023, %v1617
        %v2027 = vmul.f32 %v2025, %v1617
        %v2028 = vsub.f32 %v2018, %v2026
        %v2029 = vsub.f32 %v2019, %v2027
        %v2030 = vmul.f32 %v2028, %v2028
        %v2031 = vmul.f32 %v2029, %v2029
        %2032 = vadd.xlane.f32.xlu0 %v2030
        %v2033 = vpop.xlane.xlu0 %2032
        %2034 = vadd.xlane.f32.xlu0 %v2031
        %v2035 = vpop.xlane.xlu0 %2034
        %v2036 = vmul.f32 %v2033, %v1617
        %v2037 = vmul.f32 %v2035, %v1617
        %v2038 = vadd.f32 %v2036, 1e-12
        %v2039 = vadd.f32 %v2037, 1e-12
        %v2040 = vrsqrt.pop %v2038
        %v2041 = vrsqrt.pop %v2039
        %v2042 = vmul.f32 %v2028, %v2040
        %v2043 = vmul.f32 %v2029, %v2041
        %v2045 = vlaneseq
        %v2046 = vshrl.u32 %v2045, 7
        %v2047 = vsub.s32 0, %v2046
        %v2048 = vrot.slane %v2020, %v2047
        %v2050 = vmul.f32 %v2042, %v2048
        %v2051 = vmul.f32 %v2043, %v2048
        %v2053 = vlaneseq
        %v2054 = vshrl.u32 %v2053, 7
        %v2055 = vsub.s32 0, %v2054
        %v2056 = vrot.slane %v2021, %v2055
        %v2058 = vadd.f32 %v2050, %v2056
        %v2059 = vadd.f32 %v2051, %v2056
        %2060 = vst [vmem:[#allocation2] sm:$0xff] %v2058
        %2061 = vst [vmem:[#allocation2 + $0x8] sm:$0xff] %v2059
        %p2062 = scmp.eq.s32.totalorder %s32, 1
        // Predicated region
        $region105: #{bert_class_forward.1} parent=99 // pred_check
          %p2063 = pneg %p2062
        $region106: #{bert_class_forward.1} parent=99 // pred_check_branch
          %2065 = sbr.rel (%p2063) target = $region108
        $region107: #{bert_class_forward.1} parent=99 // pred_region
          %v2067 = vrot.slane %v2059, 7
          %vm2069 = vcmask 1040384
          %v2070 = vsel %vm2069, %v2058, %v2067
          %v2071 = vld [vmem:[%s17] sm:$0x1]
          %v2072 = vpack.c.bf16 %v2070, %v2070
          %v2073 = vld [vmem:[%s16] sm:$0xf]
          %v2074 = vld [vmem:[%s16 + $0x4] sm:$0xf]
          %v2075 = vld [vmem:[%s16 + $0x8] sm:$0xf]
          %v2076 = vld [vmem:[%s16 + $0xc] sm:$0xf]
          %v2077 = vld [vmem:[%s16 + $0x10] sm:$0xf]
          %v2078 = vld [vmem:[%s16 + $0x14] sm:$0xf]
          %v2079 = vld [vmem:[%s16 + $0x18] sm:$0xf]
          %v2080 = vld [vmem:[%s16 + $0x1c] sm:$0xf]
          %v2081 = vld [vmem:[%s16 + $0x20] sm:$0xf]
          %v2082 = vld [vmem:[%s16 + $0x24] sm:$0xf]
          %v2083 = vld [vmem:[%s16 + $0x28] sm:$0xf]
          %v2084 = vld [vmem:[%s16 + $0x2c] sm:$0xf]
          %v2085 = vld [vmem:[%s16 + $0x30] sm:$0xf]
          %v2086 = vld [vmem:[%s16 + $0x34] sm:$0xf]
          %v2087 = vld [vmem:[%s16 + $0x38] sm:$0xf]
          %v2088 = vld [vmem:[%s16 + $0x3c] sm:$0xf]
          %v2090 = vlaneseq
          %v2091 = vshrl.u32 %v2090, 7
          %v2092 = vsub.s32 0, %v2091
          %v2093 = vrot.slane %v2071, %v2092
          %v2111 = vunpack.c.l.b16 %v2073
          %v2112 = vunpack.c.l.b16 %v2074
          %v2113 = vunpack.c.l.b16 %v2075
          %v2114 = vunpack.c.l.b16 %v2076
          %v2115 = vunpack.c.l.b16 %v2077
          %v2116 = vunpack.c.l.b16 %v2078
          %v2117 = vunpack.c.l.b16 %v2079
          %v2118 = vunpack.c.l.b16 %v2080
          %v2119 = vunpack.c.l.b16 %v2081
          %v2120 = vunpack.c.l.b16 %v2082
          %v2121 = vunpack.c.l.b16 %v2083
          %v2122 = vunpack.c.l.b16 %v2084
          %v2123 = vunpack.c.l.b16 %v2085
          %v2124 = vunpack.c.l.b16 %v2086
          %v2125 = vunpack.c.l.b16 %v2087
          %v2126 = vunpack.c.l.b16 %v2088
          %v2127 = vpack.c.b16 %v2112, %v2111
          %v2128 = vpack.c.b16 %v2114, %v2113
          %v2129 = vpack.c.b16 %v2116, %v2115
          %v2130 = vpack.c.b16 %v2118, %v2117
          %v2131 = vpack.c.b16 %v2120, %v2119
          %v2132 = vpack.c.b16 %v2122, %v2121
          %v2133 = vpack.c.b16 %v2124, %v2123
          %v2134 = vpack.c.b16 %v2126, %v2125
          %2143 = vmatprep.subr.bf16.mxu0 0
          %2144 = vmatpush1.bf16.msra.mxu0 %v2127
          %2145 = vmatprep.subr.bf16.mxu0 0
          %2146 = vmatpush1.bf16.msra.mxu0 %v2128
          %2147 = vmatprep.subr.bf16.mxu0 0
          %2148 = vmatpush1.bf16.msra.mxu0 %v2129
          %2149 = vmatprep.subr.bf16.mxu0 0
          %2150 = vmatpush1.bf16.msra.mxu0 %v2130
          %2151 = vmatprep.subr.bf16.mxu0 0
          %2152 = vmatpush1.bf16.msra.mxu0 %v2131
          %2153 = vmatprep.subr.bf16.mxu0 0
          %2154 = vmatpush1.bf16.msra.mxu0 %v2132
          %2155 = vmatprep.subr.bf16.mxu0 0
          %2156 = vmatpush1.bf16.msra.mxu0 %v2133
          %2157 = vmatprep.subr.bf16.mxu0 0
          %2158 = vmatpush1.bf16.msra.mxu0 %v2134
          %2159 = vmatprep.subr.bf16.mxu0 0
          %2160 = vmatpush1.bf16.msra.mxu0 0
          %2161 = vmatprep.subr.bf16.mxu0 0
          %2162 = vmatpush1.bf16.msra.mxu0 0
          %2163 = vmatprep.subr.bf16.mxu0 0
          %2164 = vmatpush1.bf16.msra.mxu0 0
          %2165 = vmatprep.subr.bf16.mxu0 0
          %2166 = vmatpush1.bf16.msra.mxu0 0
          %2167 = vmatprep.subr.bf16.mxu0 0
          %2168 = vmatpush1.bf16.msra.mxu0 0
          %2169 = vmatprep.subr.bf16.mxu0 0
          %2170 = vmatpush1.bf16.msra.mxu0 0
          %2171 = vmatprep.subr.bf16.mxu0 0
          %2172 = vmatpush1.bf16.msra.mxu0 0
          %2173 = vmatprep.subr.bf16.mxu0 0
          %2174 = vmatpush1.bf16.msra.mxu0 0
          %2175 = vmatprep.mubr.bf16.mxu0 0
          %2176 = vmatmul.mubr.bf16.gmra.mrb[0].mxu0 %v2072
          %v2177 = vpop.f32.mrb[0].mxu0
          %v2178 = vadd.f32 %v2093, %v2177
          %v2179 = vpop.f32.mrb[0].mxu0
          %v2180 = vpop.f32.mrb[0].mxu0
          %v2181 = vpop.f32.mrb[0].mxu0
          %2182 = vdwg.mxu0
          %v2183 = vtanh.pop %v2178
          %v2184 = vld [vmem:[%s19] sm:$0x1]
          %v2185 = vpack.c.bf16 %v2183, %v2183
          %v2186 = vld [vmem:[%s18] sm:$0xf]
          %v2187 = vld [vmem:[%s18 + $0x4] sm:$0xf]
          %v2188 = vld [vmem:[%s18 + $0x8] sm:$0xf]
          %v2189 = vld [vmem:[%s18 + $0xc] sm:$0xf]
          %v2190 = vld [vmem:[%s18 + $0x10] sm:$0xf]
          %v2191 = vld [vmem:[%s18 + $0x14] sm:$0xf]
          %v2192 = vld [vmem:[%s18 + $0x18] sm:$0xf]
          %v2193 = vld [vmem:[%s18 + $0x1c] sm:$0xf]
          %v2194 = vld [vmem:[%s18 + $0x20] sm:$0xf]
          %v2195 = vld [vmem:[%s18 + $0x24] sm:$0xf]
          %v2196 = vld [vmem:[%s18 + $0x28] sm:$0xf]
          %v2197 = vld [vmem:[%s18 + $0x2c] sm:$0xf]
          %v2198 = vld [vmem:[%s18 + $0x30] sm:$0xf]
          %v2199 = vld [vmem:[%s18 + $0x34] sm:$0xf]
          %v2200 = vld [vmem:[%s18 + $0x38] sm:$0xf]
          %v2201 = vld [vmem:[%s18 + $0x3c] sm:$0xf]
          %v2203 = vlaneseq
          %v2204 = vshrl.u32 %v2203, 7
          %v2205 = vsub.s32 0, %v2204
          %v2206 = vrot.slane %v2184, %v2205
          %v2224 = vunpack.c.l.b16 %v2186
          %v2225 = vunpack.c.l.b16 %v2187
          %v2226 = vunpack.c.l.b16 %v2188
          %v2227 = vunpack.c.l.b16 %v2189
          %v2228 = vunpack.c.l.b16 %v2190
          %v2229 = vunpack.c.l.b16 %v2191
          %v2230 = vunpack.c.l.b16 %v2192
          %v2231 = vunpack.c.l.b16 %v2193
          %v2232 = vunpack.c.l.b16 %v2194
          %v2233 = vunpack.c.l.b16 %v2195
          %v2234 = vunpack.c.l.b16 %v2196
          %v2235 = vunpack.c.l.b16 %v2197
          %v2236 = vunpack.c.l.b16 %v2198
          %v2237 = vunpack.c.l.b16 %v2199
          %v2238 = vunpack.c.l.b16 %v2200
          %v2239 = vunpack.c.l.b16 %v2201
          %v2240 = vpack.c.b16 %v2225, %v2224
          %v2241 = vpack.c.b16 %v2227, %v2226
          %v2242 = vpack.c.b16 %v2229, %v2228
          %v2243 = vpack.c.b16 %v2231, %v2230
          %v2244 = vpack.c.b16 %v2233, %v2232
          %v2245 = vpack.c.b16 %v2235, %v2234
          %v2246 = vpack.c.b16 %v2237, %v2236
          %v2247 = vpack.c.b16 %v2239, %v2238
          %2256 = vmatprep.subr.bf16.mxu0 0
          %2257 = vmatpush1.bf16.msra.mxu0 %v2240
          %2258 = vmatprep.subr.bf16.mxu0 0
          %2259 = vmatpush1.bf16.msra.mxu0 %v2241
          %2260 = vmatprep.subr.bf16.mxu0 0
          %2261 = vmatpush1.bf16.msra.mxu0 %v2242
          %2262 = vmatprep.subr.bf16.mxu0 0
          %2263 = vmatpush1.bf16.msra.mxu0 %v2243
          %2264 = vmatprep.subr.bf16.mxu0 0
          %2265 = vmatpush1.bf16.msra.mxu0 %v2244
          %2266 = vmatprep.subr.bf16.mxu0 0
          %2267 = vmatpush1.bf16.msra.mxu0 %v2245
          %2268 = vmatprep.subr.bf16.mxu0 0
          %2269 = vmatpush1.bf16.msra.mxu0 %v2246
          %2270 = vmatprep.subr.bf16.mxu0 0
          %2271 = vmatpush1.bf16.msra.mxu0 %v2247
          %2272 = vmatprep.subr.bf16.mxu0 0
          %2273 = vmatpush1.bf16.msra.mxu0 0
          %2274 = vmatprep.subr.bf16.mxu0 0
          %2275 = vmatpush1.bf16.msra.mxu0 0
          %2276 = vmatprep.subr.bf16.mxu0 0
          %2277 = vmatpush1.bf16.msra.mxu0 0
          %2278 = vmatprep.subr.bf16.mxu0 0
          %2279 = vmatpush1.bf16.msra.mxu0 0
          %2280 = vmatprep.subr.bf16.mxu0 0
          %2281 = vmatpush1.bf16.msra.mxu0 0
          %2282 = vmatprep.subr.bf16.mxu0 0
          %2283 = vmatpush1.bf16.msra.mxu0 0
          %2284 = vmatprep.subr.bf16.mxu0 0
          %2285 = vmatpush1.bf16.msra.mxu0 0
          %2286 = vmatprep.subr.bf16.mxu0 0
          %2287 = vmatpush1.bf16.msra.mxu0 0
          %2288 = vmatprep.mubr.bf16.mxu0 0
          %2289 = vmatmul.mubr.bf16.gmra.mrb[0].mxu0 %v2185
          %v2290 = vpop.f32.mrb[0].mxu0
          %v2291 = vadd.f32 %v2206, %v2290
          %v2292 = vpop.f32.mrb[0].mxu0
          %v2293 = vpop.f32.mrb[0].mxu0
          %v2294 = vpop.f32.mrb[0].mxu0
          %2295 = vdwg.mxu0
          %2296 = vst [vmem:[#allocation3] sm:$0x3] %v2291
        $region108: #{bert_class_forward.1} parent=99 // pred_fallthru
          _
        // Predicated region
        $region109: #{bert_class_forward.1} parent=99 // pred_check
          %p2297 = pneg %p525
        $region110: #{bert_class_forward.1} parent=99 // pred_check_branch
          %2299 = sbr.rel (%p2297) target = $region112
        $region111: #{bert_class_forward.1} parent=99 // pred_region
          %s2301 = ssub.s32 32, 32
          %2302 = vsyncadd [#allocation4], %s2301
          %s2304 = sshll.u32 [#allocation3], 4
          %s2305 = int_to_ptr.vmem [resolvable:$true] %s2304
          %2307 = dma.vmem_to_hbm [thread:$0]  %s2305, 32, %s20, [#allocation4]
        $region112: #{bert_class_forward.1} parent=99 // pred_fallthru
          _
        // Predicated region
        $region113: #{bert_class_forward.1} parent=99 // pred_check
          %p2308 = pneg %p525
        $region114: #{bert_class_forward.1} parent=99 // pred_check_branch
          %2310 = sbr.rel (%p2308) target = $region116
        $region115: #{bert_class_forward.1} parent=99 // pred_region
          %2311 = dma.done [#allocation4], 32
        $region116: #{bert_class_forward.1} parent=99 // pred_fallthru
          _
      $region100: #{bert_class_forward.1} parent=5 // pred_fallthru
        _
      %p2312 = scmp.le.s32.totalorder 2, %s27
      // Predicated region
      $region117: #{bert_class_forward.1} parent=5 // pred_check
        %p2313 = pneg %p2312
      $region118: #{bert_class_forward.1} parent=5 // pred_check_branch
        %2315 = sbr.rel (%p2313) target = $region120
      $region119: #{bert_class_forward.1} parent=5 // pred_region
        %s2316 = ssub.s32 %s27, 2
      $region120: #{bert_class_forward.1} parent=5 // pred_fallthru
        _
    $region6: #{bert_class_forward.1} parent=1 // loop_footer
      %s31 = sadd.s32 1, %s27
    $region7: #{bert_class_forward.1} parent=1 // loop_footer_branch
      %26 = sbr.rel target = $region3
    $region8: #{bert_class_forward.1} parent=1 // loop_exit
      _
    %2317 = vsyncpa [#allocation4], 1
    %s2318 = scalar_lea.sflag [#allocation4], 1
    %2319 = vsyncpa %s2318, 1

</llo_original>
